<compile_context>
chip_gen: v5e
topology: v5e:2x2
jax: 0.10.0
libtpu: 0.0.40
codegen_flags: <defaults>
</compile_context>

<pallas_src>
import jax
import jax.numpy as jnp
from jax.experimental import pallas as pl
from jax.experimental.pallas import tpu as pltpu

LANES = 128
TILE_ROWS = 2048   # 2048 x 128 f32 = 1 MiB per input tile (mult. of 16 for bf16 tiling)
NUM_CORES = 2      # leading parallel grid axis (engages both TCs on v7x)


def _l2sp_kernel(p_ref, w0_ref, out_ref):
    """Accumulate per-tile sum((p - w0)^2) into a vreg-shaped (8,128) partial."""
    i = pl.program_id(1)  # reduction axis

    @pl.when(i == 0)
    def _():
        out_ref[...] = jnp.zeros_like(out_ref)

    d = p_ref[...].astype(jnp.float32) - w0_ref[...].astype(jnp.float32)
    sq = d * d
    # Fold (TILE_ROWS,128) -> (8,128): tile-aligned reshape + leading-axis sum
    # (pure VPU adds; the single cross-lane/sublane reduce happens in JAX).
    out_ref[...] += jnp.sum(sq.reshape(sq.shape[0] // 8, 8, LANES), axis=0)


def _pick_dtype(params):
    """Keep native dtype if uniform (e.g. bf16 models stay bf16 in HBM)."""
    dtypes = {jnp.result_type(p) for p in params}
    if len(dtypes) == 1:
        dt = dtypes.pop()
        if dt in (jnp.dtype(jnp.bfloat16), jnp.dtype(jnp.float32)):
            return dt
    return jnp.dtype(jnp.float32)


def flatten_params(params, dtype=None):
    """Concatenate flattened params, zero-pad, reshape to (rows, 128).

    For the initial (starting-point) weights this is a constant: call it once
    and reuse the result via l2sp_loss_flat().
    """
    if dtype is None:
        dtype = _pick_dtype(params)
    flat = jnp.concatenate([jnp.ravel(p).astype(dtype) for p in params])
    n = flat.shape[0]
    chunk = NUM_CORES * TILE_ROWS * LANES
    padded_n = ((n + chunk - 1) // chunk) * chunk
    flat = jnp.pad(flat, (0, padded_n - n))
    return flat.reshape(padded_n // LANES, LANES)


def l2sp_loss_flat(p2d, w02d, l2sp_alpha=0.01):
    """alpha * sum((p - w0)^2) over pre-flattened (rows, 128) buffers."""
    rows = p2d.shape[0]
    steps_per_core = rows // (NUM_CORES * TILE_ROWS)
    grid = (NUM_CORES, steps_per_core)

    in_map = lambda c, i: (c * steps_per_core + i, 0)

    partials = pl.pallas_call(
        _l2sp_kernel,
        out_shape=jax.ShapeDtypeStruct((NUM_CORES * 8, LANES), jnp.float32),
        grid_spec=pltpu.PrefetchScalarGridSpec(
            num_scalar_prefetch=0,
            grid=grid,
            in_specs=[
                pl.BlockSpec((TILE_ROWS, LANES), in_map),
                pl.BlockSpec((TILE_ROWS, LANES), in_map),
            ],
            out_specs=pl.BlockSpec((8, LANES), lambda c, i: (c, 0)),
        ),
        compiler_params=pltpu.CompilerParams(
            dimension_semantics=("parallel", "arbitrary"),
        ),
    )(p2d, w02d)

    # Tiny final reduce + alpha scale in plain JAX (no alpha baked into the
    # compiled kernel -> one compile for all alpha values).
    return jnp.asarray(l2sp_alpha, jnp.float32) * jnp.sum(partials)


def l2sp_loss(current_params, initial_params, l2sp_alpha=0.01):
    """Compute alpha * sum_i ||current_params[i] - initial_params[i]||_F^2."""
    dtype = _pick_dtype(list(current_params) + list(initial_params))
    p2d = flatten_params(current_params, dtype)
    w02d = flatten_params(initial_params, dtype)
    return l2sp_loss_flat(p2d, w02d, l2sp_alpha)


if __name__ == "__main__":
    key = jax.random.PRNGKey(0)

    # Synthetic "model" parameter shapes (deterministic init):
    #   conv weight OIHW (4, 4, 3, 3), conv bias (4,),
    #   linear weight (8, 32), linear bias (8,)
    shapes = [(4, 4, 3, 3), (4,), (8, 32), (8,)]

    keys = jax.random.split(key, 2 * len(shapes))
    current_params = [
        jax.random.normal(keys[i], s, dtype=jnp.float32) for i, s in enumerate(shapes)
    ]
    initial_params = [
        jax.random.normal(keys[len(shapes) + i], s, dtype=jnp.float32)
        for i, s in enumerate(shapes)
    ]

    alpha = 0.01

    # Hoist the constant starting-point buffer (as a real training loop would).
    w0_flat = flatten_params(initial_params)
    p_flat = flatten_params(current_params)
    loss = l2sp_loss_flat(p_flat, w0_flat, l2sp_alpha=alpha)
    loss = jax.block_until_ready(loss)

    # Convenience wrapper path (same result).
    loss2 = jax.block_until_ready(l2sp_loss(current_params, initial_params, alpha))

    # Pure-JAX reference check.
    ref = alpha * sum(
        jnp.sum((p - w0) ** 2) for p, w0 in zip(current_params, initial_params)
    )
    assert jnp.allclose(loss, ref, rtol=1e-5, atol=1e-6), (loss, ref)
    assert jnp.allclose(loss2, ref, rtol=1e-5, atol=1e-6), (loss2, ref)

    print("KERNEL_OK")
</pallas_src>

<mosaic_0001>
module attributes {stable_mosaic.version = 11 : i64} {
  func.func @_l2sp_kernel(%arg0: i32, %arg1: i32, %arg2: memref<2048x128xf32, #tpu.memory_space<vmem>>, %arg3: memref<2048x128xf32, #tpu.memory_space<vmem>>, %arg4: memref<8x128xf32, #tpu.memory_space<vmem>>) attributes {dimension_semantics = [#tpu.dimension_semantics<parallel>, #tpu.dimension_semantics<arbitrary>], iteration_bounds = array<i64: 2, 1>, scalar_prefetch = 0 : i64, scratch_operands = 0 : i64, tpu.core_type = #tpu.core_type<tc>, window_params = [{transform_indices = @transform_0, window_bounds = array<i64: 2048, 128>}, {transform_indices = @transform_1, window_bounds = array<i64: 2048, 128>}, {transform_indices = @transform_2, window_bounds = array<i64: 8, 128>}]} {
    %c0_i32 = arith.constant 0 : i32
    %0 = arith.cmpi eq, %arg1, %c0_i32 : i32
    %1 = arith.extui %0 : i1 to i32
    %c0_i32_0 = arith.constant 0 : i32
    %2 = arith.cmpi ne, %1, %c0_i32_0 : i32
    scf.if %2 {
      %cst_8 = arith.constant 0.000000e+00 : f32
      %12 = vector.broadcast %cst_8 : f32 to vector<8x128xf32>
      %c0_9 = arith.constant 0 : index
      %c0_10 = arith.constant 0 : index
      %13 = vector.load %arg4[%c0_9, %c0_10] : memref<8x128xf32, #tpu.memory_space<vmem>>, vector<8x128xf32>
      tpu.vector_store %arg4[%c0_9, %c0_10], %12 {strides = array<i32>} : memref<8x128xf32, #tpu.memory_space<vmem>>, vector<8x128xf32>,
    } else {
    }
    %c0 = arith.constant 0 : index
    %c0_1 = arith.constant 0 : index
    %3 = vector.load %arg2[%c0, %c0_1] : memref<2048x128xf32, #tpu.memory_space<vmem>>, vector<2048x128xf32>
    %c0_2 = arith.constant 0 : index
    %c0_3 = arith.constant 0 : index
    %4 = vector.load %arg3[%c0_2, %c0_3] : memref<2048x128xf32, #tpu.memory_space<vmem>>, vector<2048x128xf32>
    %5 = arith.subf %3, %4 : vector<2048x128xf32>
    %6 = arith.mulf %5, %5 : vector<2048x128xf32>
    %c0_4 = arith.constant 0 : index
    %c0_5 = arith.constant 0 : index
    %7 = vector.load %arg4[%c0_4, %c0_5] : memref<8x128xf32, #tpu.memory_space<vmem>>, vector<8x128xf32>
    %8 = vector.shape_cast %6 : vector<2048x128xf32> to vector<256x8x128xf32>
    %cst = arith.constant dense<0.000000e+00> : vector<8x128xf32>
    %9 = vector.multi_reduction <add>, %8, %cst [0] : vector<256x8x128xf32> to vector<8x128xf32>
    %10 = arith.addf %7, %9 : vector<8x128xf32>
    %c0_6 = arith.constant 0 : index
    %c0_7 = arith.constant 0 : index
    %11 = vector.load %arg4[%c0_6, %c0_7] : memref<8x128xf32, #tpu.memory_space<vmem>>, vector<8x128xf32>
    tpu.vector_store %arg4[%c0_6, %c0_7], %10 {strides = array<i32>} : memref<8x128xf32, #tpu.memory_space<vmem>>, vector<8x128xf32>,
    return
  }
  func.func @transform_0(%arg0: i32, %arg1: i32) -> (i32, i32) {
    %c1_i32 = arith.constant 1 : i32
    %0 = arith.muli %arg0, %c1_i32 : i32
    %1 = arith.addi %0, %arg1 : i32
    %c0_i32 = arith.constant 0 : i32
    %c0_i32_0 = arith.constant 0 : i32
    return %1, %c0_i32 : i32, i32
  }
  func.func @transform_1(%arg0: i32, %arg1: i32) -> (i32, i32) {
    %c1_i32 = arith.constant 1 : i32
    %0 = arith.muli %arg0, %c1_i32 : i32
    %1 = arith.addi %0, %arg1 : i32
    %c0_i32 = arith.constant 0 : i32
    %c0_i32_0 = arith.constant 0 : i32
    return %1, %c0_i32 : i32, i32
  }
  func.func @transform_2(%arg0: i32, %arg1: i32) -> (i32, i32) {
    %c0_i32 = arith.constant 0 : i32
    %c0_i32_0 = arith.constant 0 : i32
    return %arg0, %c0_i32 : i32, i32
  }
}

</mosaic_0001>

<llo_original>
// kernel: tpu_custom_call.1
$region0: #{tpu_custom_call.1}
  #allocation0 [shape = 'u32[]', space=smem, size = 0x4, offset = 0x4, fixed_abs, tag = 'smem constant byte address 0x4 - core index']
  #allocation1 [shape = 'u32[72,128]{1,0:T(1,128)}', space=vmem, size = 0x9000, scoped, tag = 'internal scratch']
  %s0 = inlined_call_operand.hbm [shape: f32[4096,128], index: 0, kind: input, shape index: {}]
  %s1 = inlined_call_operand.hbm [shape: f32[4096,128], index: 1, kind: input, shape index: {}]
  %s2 = inlined_call_operand.hbm [shape: f32[16,128], index: 2, kind: output, shape index: {}]
  %s3 = sld [smem:[#allocation0]]
  $region53: #{tpu_custom_call.1} parent=0
    _
  %s5 = ssub.s32 1, %s3
  %s6 = scalar_select 0, %s5, %s3
  $region1: #{tpu_custom_call.1} parent=0
    #allocation2 [shape = 'u8[2097152]{0}', space=vmem, size = 0x200000, scoped, tag = 'input window, operand 0']
    #allocation3 [shape = 's32[2]{0}', space=sflag, size = 0x8, scoped, tag = 'scoped memory for tpu_custom_call.1']
    #allocation4 [shape = 's32[2]{0}', space=sflag, size = 0x8, scoped, tag = 'scoped memory for tpu_custom_call.1']
    #allocation5 [shape = 'u8[2097152]{0}', space=vmem, size = 0x200000, scoped, tag = 'input window, operand 1']
    #allocation6 [shape = 's32[2]{0}', space=sflag, size = 0x8, scoped, tag = 'scoped memory for tpu_custom_call.1']
    #allocation7 [shape = 'u8[8192]{0}', space=vmem, size = 0x2000, scoped, tag = 'output window, operand 0']
    %7 = vsyncpa [#allocation3], 0
    %s8 = scalar_lea.sflag [#allocation3], 1
    %9 = vsyncpa %s8, 0
    %10 = vsyncpa [#allocation6], 0
    %s11 = scalar_lea.sflag [#allocation6], 1
    %12 = vsyncpa %s11, 0
    %13 = vsyncpa [#allocation4], 0
    %s14 = scalar_lea.sflag [#allocation4], 1
    %15 = vsyncpa %s14, 0
    loop: start=0, step=1, limit=4
    $region2: #{tpu_custom_call.1} parent=1 // loop_pre_header
      _
    $region3: #{tpu_custom_call.1} parent=1 // loop_header
      %s17 = sphi 0, %s21
      %p18 = scmp.ge.s32.totalorder %s17, 4
      %s24 = sphi 0, %s36
      %s25 = sphi 0, %s32
      %s26 = sphi 0, %s24
      %s27 = sphi 0, %s25
      %s28 = sphi 0, %s26
      %s29 = sphi 0, %s27
      %s41 = sphi 0, %s43
      %s44 = sphi 0, %s41
      %s45 = sphi 0, %s44
      %s61 = sphi 0, %s45
      %s69 = sphi 0, %s71
      %s72 = sphi 0, %s69
      %s73 = sphi 0, %s72
      %s89 = sphi 0, %s73
      %s95 = sphi 0, %s97
      %s98 = sphi 0, %s95
      %s99 = sphi 0, %s98
      %s115 = sphi 0, %s99
    $region4: #{tpu_custom_call.1} parent=1 // loop_header_branch
      %20 = sbr.rel (%p18) target = $region8
    $region5: #{tpu_custom_call.1} parent=1 // loop_body
      %s22 = ssub.s32 %s17, 1
      %s23 = ssub.s32 %s17, 2
      %s30 = sadd.s32 1, %s25
      %p31 = scmp.ge.s32.totalorder %s30, 1
      %s32 = scalar_select %p31, 0, %s30
      %s33 = sadd.s32 1, %s24
      %s34 = scalar_select %p31, %s33, %s24
      %p35 = scmp.ge.s32.totalorder %s34, 2
      %s36 = scalar_select %p35, 0, %s34
      %s37 = sadd.s32 %s24, %s25
      %s38 = sadd.s32 %s36, %s32
      %s39 = ssub.s32 %s37, %s38
      %p40 = scmp.eq.s32.totalorder %s39, 0
      %s42 = sadd.s32 %s41, 1
      %s43 = scalar_select %p40, %s41, %s42
      %p46 = pneg %p40
      %p47 = scmp.eq.s32.totalorder %s17, 1
      %p48 = por %p46, %p47
      %p49 = scmp.ne.s32.totalorder %s41, %s44
      %p50 = scmp.eq.s32.totalorder %s17, 0
      %p51 = por %p49, %p50
      %p52 = scmp.ne.s32.totalorder %s41, %s44
      %p53 = scmp.eq.s32.totalorder %s22, 1
      %p54 = por %p52, %p53
      %p55 = scmp.ne.s32.totalorder %s44, %s45
      %p56 = scmp.eq.s32.totalorder %s22, 0
      %p57 = por %p55, %p56
      %p58 = scmp.ne.s32.totalorder %s44, %s45
      %p59 = scmp.eq.s32.totalorder %s23, 1
      %p60 = por %p58, %p59
      %p62 = scmp.ne.s32.totalorder %s45, %s61
      %p63 = scmp.eq.s32.totalorder %s23, 0
      %p64 = por %p62, %p63
      %s65 = sadd.s32 %s24, %s25
      %s66 = sadd.s32 %s36, %s32
      %s67 = ssub.s32 %s65, %s66
      %p68 = scmp.eq.s32.totalorder %s67, 0
      %s70 = sadd.s32 %s69, 1
      %s71 = scalar_select %p68, %s69, %s70
      %p74 = pneg %p68
      %p75 = scmp.eq.s32.totalorder %s17, 1
      %p76 = por %p74, %p75
      %p77 = scmp.ne.s32.totalorder %s69, %s72
      %p78 = scmp.eq.s32.totalorder %s17, 0
      %p79 = por %p77, %p78
      %p80 = scmp.ne.s32.totalorder %s69, %s72
      %p81 = scmp.eq.s32.totalorder %s22, 1
      %p82 = por %p80, %p81
      %p83 = scmp.ne.s32.totalorder %s72, %s73
      %p84 = scmp.eq.s32.totalorder %s22, 0
      %p85 = por %p83, %p84
      %p86 = scmp.ne.s32.totalorder %s72, %s73
      %p87 = scmp.eq.s32.totalorder %s23, 1
      %p88 = por %p86, %p87
      %p90 = scmp.ne.s32.totalorder %s73, %s89
      %p91 = scmp.eq.s32.totalorder %s23, 0
      %p92 = por %p90, %p91
      %s93 = ssub.s32 %s24, %s36
      %p94 = scmp.eq.s32.totalorder %s93, 0
      %s96 = sadd.s32 %s95, 1
      %s97 = scalar_select %p94, %s95, %s96
      %p100 = pneg %p94
      %p101 = scmp.eq.s32.totalorder %s17, 1
      %p102 = por %p100, %p101
      %p103 = scmp.ne.s32.totalorder %s95, %s98
      %p104 = scmp.eq.s32.totalorder %s17, 0
      %p105 = por %p103, %p104
      %p106 = scmp.ne.s32.totalorder %s95, %s98
      %p107 = scmp.eq.s32.totalorder %s22, 1
      %p108 = por %p106, %p107
      %p109 = scmp.ne.s32.totalorder %s98, %s99
      %p110 = scmp.eq.s32.totalorder %s22, 0
      %p111 = por %p109, %p110
      %p112 = scmp.ne.s32.totalorder %s98, %s99
      %p113 = scmp.eq.s32.totalorder %s23, 1
      %p114 = por %p112, %p113
      %p116 = scmp.ne.s32.totalorder %s99, %s115
      %p117 = scmp.eq.s32.totalorder %s23, 0
      %p118 = por %p116, %p117
      %p119 = scmp.le.s32.totalorder 1, %s17
      %p120 = scmp.lt.s32.totalorder %s17, 3
      %p121 = pnand %p119, %p120
      %p122 = pneg %p121
      // Predicated region
      $region9: #{tpu_custom_call.1} parent=5 // pred_check
        _
      $region10: #{tpu_custom_call.1} parent=5 // pred_check_branch
        %124 = sbr.rel (%p121) target = $region12
      $region11: #{tpu_custom_call.1} parent=5 // pred_region
        %s125 = ssub.s32 %s17, 1
      $region12: #{tpu_custom_call.1} parent=5 // pred_fallthru
        _
      %p126 = scmp.lt.s32.totalorder %s17, 2
      // Predicated region
      $region13: #{tpu_custom_call.1} parent=5 // pred_check
        %p127 = pneg %p126
      $region14: #{tpu_custom_call.1} parent=5 // pred_check_branch
        %129 = sbr.rel (%p127) target = $region16
      $region15: #{tpu_custom_call.1} parent=5 // pred_region
        // Predicated region
        $region17: #{tpu_custom_call.1} parent=15 // pred_check
          %p130 = pneg %p51
        $region18: #{tpu_custom_call.1} parent=15 // pred_check_branch
          %132 = sbr.rel (%p130) target = $region20
        $region19: #{tpu_custom_call.1} parent=15 // pred_region
          %s133 = sand.u32 %s41, 1
          %s134 = scalar_lea.sflag [#allocation3], %s133
          %s135 = sand.u32 %s41, 1
          %s136 = smul.addr %s135, 2048
          %s137 = scalar_lea.vmem [#allocation2], %s136
          %s138 = sadd.s32 %s24, %s25
          %s139 = smul.u32 256, %s138
          %141 = vsyncadd %s134, 0
          %s142 = smul.addr %s139, 8
          %s143 = scalar_lea.hbm %s0, %s142
          %s144 = sshll.u32 %s143, 4
          %s145 = int_to_ptr.hbm [resolvable:$true] %s144
          %s146 = sshll.u32 %s137, 4
          %s147 = int_to_ptr.vmem [resolvable:$true] %s146
          %152 = dma.hbm_to_vmem [thread:$0]  %s145, 32768, %s147, %s134, 128, 128, 8
        $region20: #{tpu_custom_call.1} parent=15 // pred_fallthru
          _
        // Predicated region
        $region21: #{tpu_custom_call.1} parent=15 // pred_check
          %p153 = pneg %p79
        $region22: #{tpu_custom_call.1} parent=15 // pred_check_branch
          %155 = sbr.rel (%p153) target = $region24
        $region23: #{tpu_custom_call.1} parent=15 // pred_region
          %s156 = sand.u32 %s69, 1
          %s157 = scalar_lea.sflag [#allocation6], %s156
          %s158 = sand.u32 %s69, 1
          %s159 = smul.addr %s158, 2048
          %s160 = scalar_lea.vmem [#allocation5], %s159
          %s161 = sadd.s32 %s24, %s25
          %s162 = smul.u32 256, %s161
          %164 = vsyncadd %s157, 0
          %s165 = smul.addr %s162, 8
          %s166 = scalar_lea.hbm %s1, %s165
          %s167 = sshll.u32 %s166, 4
          %s168 = int_to_ptr.hbm [resolvable:$true] %s167
          %s169 = sshll.u32 %s160, 4
          %s170 = int_to_ptr.vmem [resolvable:$true] %s169
          %175 = dma.hbm_to_vmem [thread:$0]  %s168, 32768, %s170, %s157, 128, 128, 8
        $region24: #{tpu_custom_call.1} parent=15 // pred_fallthru
          _
      $region16: #{tpu_custom_call.1} parent=5 // pred_fallthru
        _
      %p176 = scmp.le.s32.totalorder 1, %s17
      %p177 = scmp.lt.s32.totalorder %s17, 3
      %p178 = pnand %p176, %p177
      %p179 = pneg %p178
      // Predicated region
      $region25: #{tpu_custom_call.1} parent=5 // pred_check
        _
      $region26: #{tpu_custom_call.1} parent=5 // pred_check_branch
        %181 = sbr.rel (%p178) target = $region28
      $region27: #{tpu_custom_call.1} parent=5 // pred_region
        %s182 = ssub.s32 %s17, 1
        %s183 = sand.u32 %s44, 1
        %s184 = scalar_lea.sflag [#allocation3], %s183
        %s185 = sand.u32 %s44, 1
        %s186 = smul.addr %s185, 2048
        %s187 = scalar_lea.vmem [#allocation2], %s186
        // Predicated region
        $region29: #{tpu_custom_call.1} parent=27 // pred_check
          %p188 = pneg %p57
        $region30: #{tpu_custom_call.1} parent=27 // pred_check_branch
          %190 = sbr.rel (%p188) target = $region32
        $region31: #{tpu_custom_call.1} parent=27 // pred_region
          %192 = dma.done %s184, 32768
        $region32: #{tpu_custom_call.1} parent=27 // pred_fallthru
          _
        %s193 = sand.u32 %s72, 1
        %s194 = scalar_lea.sflag [#allocation6], %s193
        %s195 = sand.u32 %s72, 1
        %s196 = smul.addr %s195, 2048
        %s197 = scalar_lea.vmem [#allocation5], %s196
        // Predicated region
        $region33: #{tpu_custom_call.1} parent=27 // pred_check
          %p198 = pneg %p85
        $region34: #{tpu_custom_call.1} parent=27 // pred_check_branch
          %200 = sbr.rel (%p198) target = $region36
        $region35: #{tpu_custom_call.1} parent=27 // pred_region
          %202 = dma.done %s194, 32768
        $region36: #{tpu_custom_call.1} parent=27 // pred_fallthru
          _
        %s203 = sand.u32 %s44, 1
        %s204 = scalar_lea.sflag [#allocation3], %s203
        %s205 = sand.u32 %s44, 1
        %s206 = smul.addr %s205, 2048
        %s207 = scalar_lea.vmem [#allocation2], %s206
        %p208 = pneg %p57
        %p209 = pneg %p54
        %s210 = sand.u32 %s72, 1
        %s211 = scalar_lea.sflag [#allocation6], %s210
        %s212 = sand.u32 %s72, 1
        %s213 = smul.addr %s212, 2048
        %s214 = scalar_lea.vmem [#allocation5], %s213
        %p215 = pneg %p85
        %p216 = pneg %p82
        %p217 = pneg %p111
        %p218 = pneg %p108
        %s219 = sand.u32 %s98, 1
        %s220 = scalar_lea.sflag [#allocation4], %s219
        %s221 = sand.u32 %s98, 1
        %s222 = smul.addr %s221, 8
        %s223 = scalar_lea.vmem [#allocation7], %s222
        %s224 = sadd.s32 %s26, %s27
        %s225 = smul.u32 256, %s224
        %s226 = sadd.s32 %s26, %s27
        %s227 = smul.u32 256, %s226
        %p228 = scmp.eq.s32.totalorder %s27, 0
        // Predicated region
        $region37: #{tpu_custom_call.1} parent=27 // pred_check
          %p229 = pneg %p228
        $region38: #{tpu_custom_call.1} parent=27 // pred_check_branch
          %231 = sbr.rel (%p229) target = $region40
        $region39: #{tpu_custom_call.1} parent=27 // pred_region
          %232 = vst [vmem:[%s223] sm:$0xff] 0.0
        $region40: #{tpu_custom_call.1} parent=27 // pred_fallthru
          _
        %v233 = vld [vmem:[%s187] sm:$0xff]
        %v234 = vld [vmem:[%s187 + $0x8] sm:$0xff]
        %v235 = vld [vmem:[%s187 + $0x10] sm:$0xff]
        %v236 = vld [vmem:[%s187 + $0x18] sm:$0xff]
        %v237 = vld [vmem:[%s187 + $0x20] sm:$0xff]
        %v238 = vld [vmem:[%s187 + $0x28] sm:$0xff]
        %v239 = vld [vmem:[%s187 + $0x30] sm:$0xff]
        %v240 = vld [vmem:[%s187 + $0x38] sm:$0xff]
        %v241 = vld [vmem:[%s187 + $0x40] sm:$0xff]
        %v242 = vld [vmem:[%s187 + $0x48] sm:$0xff]
        %v243 = vld [vmem:[%s187 + $0x50] sm:$0xff]
        %v244 = vld [vmem:[%s187 + $0x58] sm:$0xff]
        %v245 = vld [vmem:[%s187 + $0x60] sm:$0xff]
        %v246 = vld [vmem:[%s187 + $0x68] sm:$0xff]
        %v247 = vld [vmem:[%s187 + $0x70] sm:$0xff]
        %v248 = vld [vmem:[%s187 + $0x78] sm:$0xff]
        %v249 = vld [vmem:[%s187 + $0x80] sm:$0xff]
        %v250 = vld [vmem:[%s187 + $0x88] sm:$0xff]
        %v251 = vld [vmem:[%s187 + $0x90] sm:$0xff]
        %v252 = vld [vmem:[%s187 + $0x98] sm:$0xff]
        %v253 = vld [vmem:[%s187 + $0xa0] sm:$0xff]
        %v254 = vld [vmem:[%s187 + $0xa8] sm:$0xff]
        %v255 = vld [vmem:[%s187 + $0xb0] sm:$0xff]
        %v256 = vld [vmem:[%s187 + $0xb8] sm:$0xff]
        %v257 = vld [vmem:[%s187 + $0xc0] sm:$0xff]
        %v258 = vld [vmem:[%s187 + $0xc8] sm:$0xff]
        %v259 = vld [vmem:[%s187 + $0xd0] sm:$0xff]
        %v260 = vld [vmem:[%s187 + $0xd8] sm:$0xff]
        %v261 = vld [vmem:[%s187 + $0xe0] sm:$0xff]
        %v262 = vld [vmem:[%s187 + $0xe8] sm:$0xff]
        %v263 = vld [vmem:[%s187 + $0xf0] sm:$0xff]
        %v264 = vld [vmem:[%s187 + $0xf8] sm:$0xff]
        %v265 = vld [vmem:[%s187 + $0x100] sm:$0xff]
        %v266 = vld [vmem:[%s187 + $0x108] sm:$0xff]
        %v267 = vld [vmem:[%s187 + $0x110] sm:$0xff]
        %v268 = vld [vmem:[%s187 + $0x118] sm:$0xff]
        %v269 = vld [vmem:[%s187 + $0x120] sm:$0xff]
        %v270 = vld [vmem:[%s187 + $0x128] sm:$0xff]
        %v271 = vld [vmem:[%s187 + $0x130] sm:$0xff]
        %v272 = vld [vmem:[%s187 + $0x138] sm:$0xff]
        %v273 = vld [vmem:[%s187 + $0x140] sm:$0xff]
        %v274 = vld [vmem:[%s187 + $0x148] sm:$0xff]
        %v275 = vld [vmem:[%s187 + $0x150] sm:$0xff]
        %v276 = vld [vmem:[%s187 + $0x158] sm:$0xff]
        %v277 = vld [vmem:[%s187 + $0x160] sm:$0xff]
        %v278 = vld [vmem:[%s187 + $0x168] sm:$0xff]
        %v279 = vld [vmem:[%s187 + $0x170] sm:$0xff]
        %v280 = vld [vmem:[%s187 + $0x178] sm:$0xff]
        %v281 = vld [vmem:[%s187 + $0x180] sm:$0xff]
        %v282 = vld [vmem:[%s187 + $0x188] sm:$0xff]
        %v283 = vld [vmem:[%s187 + $0x190] sm:$0xff]
        %v284 = vld [vmem:[%s187 + $0x198] sm:$0xff]
        %v285 = vld [vmem:[%s187 + $0x1a0] sm:$0xff]
        %v286 = vld [vmem:[%s187 + $0x1a8] sm:$0xff]
        %v287 = vld [vmem:[%s187 + $0x1b0] sm:$0xff]
        %v288 = vld [vmem:[%s187 + $0x1b8] sm:$0xff]
        %v289 = vld [vmem:[%s187 + $0x1c0] sm:$0xff]
        %v290 = vld [vmem:[%s187 + $0x1c8] sm:$0xff]
        %v291 = vld [vmem:[%s187 + $0x1d0] sm:$0xff]
        %v292 = vld [vmem:[%s187 + $0x1d8] sm:$0xff]
        %v293 = vld [vmem:[%s187 + $0x1e0] sm:$0xff]
        %v294 = vld [vmem:[%s187 + $0x1e8] sm:$0xff]
        %v295 = vld [vmem:[%s187 + $0x1f0] sm:$0xff]
        %v296 = vld [vmem:[%s187 + $0x1f8] sm:$0xff]
        %v297 = vld [vmem:[%s187 + $0x200] sm:$0xff]
        %v298 = vld [vmem:[%s187 + $0x208] sm:$0xff]
        %v299 = vld [vmem:[%s187 + $0x210] sm:$0xff]
        %v300 = vld [vmem:[%s187 + $0x218] sm:$0xff]
        %v301 = vld [vmem:[%s187 + $0x220] sm:$0xff]
        %v302 = vld [vmem:[%s187 + $0x228] sm:$0xff]
        %v303 = vld [vmem:[%s187 + $0x230] sm:$0xff]
        %v304 = vld [vmem:[%s187 + $0x238] sm:$0xff]
        %v305 = vld [vmem:[%s187 + $0x240] sm:$0xff]
        %v306 = vld [vmem:[%s187 + $0x248] sm:$0xff]
        %v307 = vld [vmem:[%s187 + $0x250] sm:$0xff]
        %v308 = vld [vmem:[%s187 + $0x258] sm:$0xff]
        %v309 = vld [vmem:[%s187 + $0x260] sm:$0xff]
        %v310 = vld [vmem:[%s187 + $0x268] sm:$0xff]
        %v311 = vld [vmem:[%s187 + $0x270] sm:$0xff]
        %v312 = vld [vmem:[%s187 + $0x278] sm:$0xff]
        %v313 = vld [vmem:[%s187 + $0x280] sm:$0xff]
        %v314 = vld [vmem:[%s187 + $0x288] sm:$0xff]
        %v315 = vld [vmem:[%s187 + $0x290] sm:$0xff]
        %v316 = vld [vmem:[%s187 + $0x298] sm:$0xff]
        %v317 = vld [vmem:[%s187 + $0x2a0] sm:$0xff]
        %v318 = vld [vmem:[%s187 + $0x2a8] sm:$0xff]
        %v319 = vld [vmem:[%s187 + $0x2b0] sm:$0xff]
        %v320 = vld [vmem:[%s187 + $0x2b8] sm:$0xff]
        %v321 = vld [vmem:[%s187 + $0x2c0] sm:$0xff]
        %v322 = vld [vmem:[%s187 + $0x2c8] sm:$0xff]
        %v323 = vld [vmem:[%s187 + $0x2d0] sm:$0xff]
        %v324 = vld [vmem:[%s187 + $0x2d8] sm:$0xff]
        %v325 = vld [vmem:[%s187 + $0x2e0] sm:$0xff]
        %v326 = vld [vmem:[%s187 + $0x2e8] sm:$0xff]
        %v327 = vld [vmem:[%s187 + $0x2f0] sm:$0xff]
        %v328 = vld [vmem:[%s187 + $0x2f8] sm:$0xff]
        %v329 = vld [vmem:[%s187 + $0x300] sm:$0xff]
        %v330 = vld [vmem:[%s187 + $0x308] sm:$0xff]
        %v331 = vld [vmem:[%s187 + $0x310] sm:$0xff]
        %v332 = vld [vmem:[%s187 + $0x318] sm:$0xff]
        %v333 = vld [vmem:[%s187 + $0x320] sm:$0xff]
        %v334 = vld [vmem:[%s187 + $0x328] sm:$0xff]
        %v335 = vld [vmem:[%s187 + $0x330] sm:$0xff]
        %v336 = vld [vmem:[%s187 + $0x338] sm:$0xff]
        %v337 = vld [vmem:[%s187 + $0x340] sm:$0xff]
        %v338 = vld [vmem:[%s187 + $0x348] sm:$0xff]
        %v339 = vld [vmem:[%s187 + $0x350] sm:$0xff]
        %v340 = vld [vmem:[%s187 + $0x358] sm:$0xff]
        %v341 = vld [vmem:[%s187 + $0x360] sm:$0xff]
        %v342 = vld [vmem:[%s187 + $0x368] sm:$0xff]
        %v343 = vld [vmem:[%s187 + $0x370] sm:$0xff]
        %v344 = vld [vmem:[%s187 + $0x378] sm:$0xff]
        %v345 = vld [vmem:[%s187 + $0x380] sm:$0xff]
        %v346 = vld [vmem:[%s187 + $0x388] sm:$0xff]
        %v347 = vld [vmem:[%s187 + $0x390] sm:$0xff]
        %v348 = vld [vmem:[%s187 + $0x398] sm:$0xff]
        %v349 = vld [vmem:[%s187 + $0x3a0] sm:$0xff]
        %v350 = vld [vmem:[%s187 + $0x3a8] sm:$0xff]
        %v351 = vld [vmem:[%s187 + $0x3b0] sm:$0xff]
        %v352 = vld [vmem:[%s187 + $0x3b8] sm:$0xff]
        %v353 = vld [vmem:[%s187 + $0x3c0] sm:$0xff]
        %v354 = vld [vmem:[%s187 + $0x3c8] sm:$0xff]
        %v355 = vld [vmem:[%s187 + $0x3d0] sm:$0xff]
        %v356 = vld [vmem:[%s187 + $0x3d8] sm:$0xff]
        %v357 = vld [vmem:[%s187 + $0x3e0] sm:$0xff]
        %v358 = vld [vmem:[%s187 + $0x3e8] sm:$0xff]
        %v359 = vld [vmem:[%s187 + $0x3f0] sm:$0xff]
        %v360 = vld [vmem:[%s187 + $0x3f8] sm:$0xff]
        %v361 = vld [vmem:[%s187 + $0x400] sm:$0xff]
        %v362 = vld [vmem:[%s187 + $0x408] sm:$0xff]
        %v363 = vld [vmem:[%s187 + $0x410] sm:$0xff]
        %v364 = vld [vmem:[%s187 + $0x418] sm:$0xff]
        %v365 = vld [vmem:[%s187 + $0x420] sm:$0xff]
        %v366 = vld [vmem:[%s187 + $0x428] sm:$0xff]
        %v367 = vld [vmem:[%s187 + $0x430] sm:$0xff]
        %v368 = vld [vmem:[%s187 + $0x438] sm:$0xff]
        %v369 = vld [vmem:[%s187 + $0x440] sm:$0xff]
        %v370 = vld [vmem:[%s187 + $0x448] sm:$0xff]
        %v371 = vld [vmem:[%s187 + $0x450] sm:$0xff]
        %v372 = vld [vmem:[%s187 + $0x458] sm:$0xff]
        %v373 = vld [vmem:[%s187 + $0x460] sm:$0xff]
        %v374 = vld [vmem:[%s187 + $0x468] sm:$0xff]
        %v375 = vld [vmem:[%s187 + $0x470] sm:$0xff]
        %v376 = vld [vmem:[%s187 + $0x478] sm:$0xff]
        %v377 = vld [vmem:[%s187 + $0x480] sm:$0xff]
        %v378 = vld [vmem:[%s187 + $0x488] sm:$0xff]
        %v379 = vld [vmem:[%s187 + $0x490] sm:$0xff]
        %v380 = vld [vmem:[%s187 + $0x498] sm:$0xff]
        %v381 = vld [vmem:[%s187 + $0x4a0] sm:$0xff]
        %v382 = vld [vmem:[%s187 + $0x4a8] sm:$0xff]
        %v383 = vld [vmem:[%s187 + $0x4b0] sm:$0xff]
        %v384 = vld [vmem:[%s187 + $0x4b8] sm:$0xff]
        %v385 = vld [vmem:[%s187 + $0x4c0] sm:$0xff]
        %v386 = vld [vmem:[%s187 + $0x4c8] sm:$0xff]
        %v387 = vld [vmem:[%s187 + $0x4d0] sm:$0xff]
        %v388 = vld [vmem:[%s187 + $0x4d8] sm:$0xff]
        %v389 = vld [vmem:[%s187 + $0x4e0] sm:$0xff]
        %v390 = vld [vmem:[%s187 + $0x4e8] sm:$0xff]
        %v391 = vld [vmem:[%s187 + $0x4f0] sm:$0xff]
        %v392 = vld [vmem:[%s187 + $0x4f8] sm:$0xff]
        %v393 = vld [vmem:[%s187 + $0x500] sm:$0xff]
        %v394 = vld [vmem:[%s187 + $0x508] sm:$0xff]
        %v395 = vld [vmem:[%s187 + $0x510] sm:$0xff]
        %v396 = vld [vmem:[%s187 + $0x518] sm:$0xff]
        %v397 = vld [vmem:[%s187 + $0x520] sm:$0xff]
        %v398 = vld [vmem:[%s187 + $0x528] sm:$0xff]
        %v399 = vld [vmem:[%s187 + $0x530] sm:$0xff]
        %v400 = vld [vmem:[%s187 + $0x538] sm:$0xff]
        %v401 = vld [vmem:[%s187 + $0x540] sm:$0xff]
        %v402 = vld [vmem:[%s187 + $0x548] sm:$0xff]
        %v403 = vld [vmem:[%s187 + $0x550] sm:$0xff]
        %v404 = vld [vmem:[%s187 + $0x558] sm:$0xff]
        %v405 = vld [vmem:[%s187 + $0x560] sm:$0xff]
        %v406 = vld [vmem:[%s187 + $0x568] sm:$0xff]
        %v407 = vld [vmem:[%s187 + $0x570] sm:$0xff]
        %v408 = vld [vmem:[%s187 + $0x578] sm:$0xff]
        %v409 = vld [vmem:[%s187 + $0x580] sm:$0xff]
        %v410 = vld [vmem:[%s187 + $0x588] sm:$0xff]
        %v411 = vld [vmem:[%s187 + $0x590] sm:$0xff]
        %v412 = vld [vmem:[%s187 + $0x598] sm:$0xff]
        %v413 = vld [vmem:[%s187 + $0x5a0] sm:$0xff]
        %v414 = vld [vmem:[%s187 + $0x5a8] sm:$0xff]
        %v415 = vld [vmem:[%s187 + $0x5b0] sm:$0xff]
        %v416 = vld [vmem:[%s187 + $0x5b8] sm:$0xff]
        %v417 = vld [vmem:[%s187 + $0x5c0] sm:$0xff]
        %v418 = vld [vmem:[%s187 + $0x5c8] sm:$0xff]
        %v419 = vld [vmem:[%s187 + $0x5d0] sm:$0xff]
        %v420 = vld [vmem:[%s187 + $0x5d8] sm:$0xff]
        %v421 = vld [vmem:[%s187 + $0x5e0] sm:$0xff]
        %v422 = vld [vmem:[%s187 + $0x5e8] sm:$0xff]
        %v423 = vld [vmem:[%s187 + $0x5f0] sm:$0xff]
        %v424 = vld [vmem:[%s187 + $0x5f8] sm:$0xff]
        %v425 = vld [vmem:[%s187 + $0x600] sm:$0xff]
        %v426 = vld [vmem:[%s187 + $0x608] sm:$0xff]
        %v427 = vld [vmem:[%s187 + $0x610] sm:$0xff]
        %v428 = vld [vmem:[%s187 + $0x618] sm:$0xff]
        %v429 = vld [vmem:[%s187 + $0x620] sm:$0xff]
        %v430 = vld [vmem:[%s187 + $0x628] sm:$0xff]
        %v431 = vld [vmem:[%s187 + $0x630] sm:$0xff]
        %v432 = vld [vmem:[%s187 + $0x638] sm:$0xff]
        %v433 = vld [vmem:[%s187 + $0x640] sm:$0xff]
        %v434 = vld [vmem:[%s187 + $0x648] sm:$0xff]
        %v435 = vld [vmem:[%s187 + $0x650] sm:$0xff]
        %v436 = vld [vmem:[%s187 + $0x658] sm:$0xff]
        %v437 = vld [vmem:[%s187 + $0x660] sm:$0xff]
        %v438 = vld [vmem:[%s187 + $0x668] sm:$0xff]
        %v439 = vld [vmem:[%s187 + $0x670] sm:$0xff]
        %v440 = vld [vmem:[%s187 + $0x678] sm:$0xff]
        %v441 = vld [vmem:[%s187 + $0x680] sm:$0xff]
        %v442 = vld [vmem:[%s187 + $0x688] sm:$0xff]
        %v443 = vld [vmem:[%s187 + $0x690] sm:$0xff]
        %v444 = vld [vmem:[%s187 + $0x698] sm:$0xff]
        %v445 = vld [vmem:[%s187 + $0x6a0] sm:$0xff]
        %v446 = vld [vmem:[%s187 + $0x6a8] sm:$0xff]
        %v447 = vld [vmem:[%s187 + $0x6b0] sm:$0xff]
        %v448 = vld [vmem:[%s187 + $0x6b8] sm:$0xff]
        %v449 = vld [vmem:[%s187 + $0x6c0] sm:$0xff]
        %v450 = vld [vmem:[%s187 + $0x6c8] sm:$0xff]
        %v451 = vld [vmem:[%s187 + $0x6d0] sm:$0xff]
        %v452 = vld [vmem:[%s187 + $0x6d8] sm:$0xff]
        %v453 = vld [vmem:[%s187 + $0x6e0] sm:$0xff]
        %v454 = vld [vmem:[%s187 + $0x6e8] sm:$0xff]
        %v455 = vld [vmem:[%s187 + $0x6f0] sm:$0xff]
        %v456 = vld [vmem:[%s187 + $0x6f8] sm:$0xff]
        %v457 = vld [vmem:[%s187 + $0x700] sm:$0xff]
        %v458 = vld [vmem:[%s187 + $0x708] sm:$0xff]
        %v459 = vld [vmem:[%s187 + $0x710] sm:$0xff]
        %v460 = vld [vmem:[%s187 + $0x718] sm:$0xff]
        %v461 = vld [vmem:[%s187 + $0x720] sm:$0xff]
        %v462 = vld [vmem:[%s187 + $0x728] sm:$0xff]
        %v463 = vld [vmem:[%s187 + $0x730] sm:$0xff]
        %v464 = vld [vmem:[%s187 + $0x738] sm:$0xff]
        %v465 = vld [vmem:[%s187 + $0x740] sm:$0xff]
        %v466 = vld [vmem:[%s187 + $0x748] sm:$0xff]
        %v467 = vld [vmem:[%s187 + $0x750] sm:$0xff]
        %v468 = vld [vmem:[%s187 + $0x758] sm:$0xff]
        %v469 = vld [vmem:[%s187 + $0x760] sm:$0xff]
        %v470 = vld [vmem:[%s187 + $0x768] sm:$0xff]
        %v471 = vld [vmem:[%s187 + $0x770] sm:$0xff]
        %v472 = vld [vmem:[%s187 + $0x778] sm:$0xff]
        %v473 = vld [vmem:[%s187 + $0x780] sm:$0xff]
        %v474 = vld [vmem:[%s187 + $0x788] sm:$0xff]
        %v475 = vld [vmem:[%s187 + $0x790] sm:$0xff]
        %v476 = vld [vmem:[%s187 + $0x798] sm:$0xff]
        %v477 = vld [vmem:[%s187 + $0x7a0] sm:$0xff]
        %v478 = vld [vmem:[%s187 + $0x7a8] sm:$0xff]
        %v479 = vld [vmem:[%s187 + $0x7b0] sm:$0xff]
        %v480 = vld [vmem:[%s187 + $0x7b8] sm:$0xff]
        %v481 = vld [vmem:[%s187 + $0x7c0] sm:$0xff]
        %v482 = vld [vmem:[%s187 + $0x7c8] sm:$0xff]
        %v483 = vld [vmem:[%s187 + $0x7d0] sm:$0xff]
        %v484 = vld [vmem:[%s187 + $0x7d8] sm:$0xff]
        %v485 = vld [vmem:[%s187 + $0x7e0] sm:$0xff]
        %v486 = vld [vmem:[%s187 + $0x7e8] sm:$0xff]
        %v487 = vld [vmem:[%s187 + $0x7f0] sm:$0xff]
        %v488 = vld [vmem:[%s187 + $0x7f8] sm:$0xff]
        %v489 = vld [vmem:[%s197] sm:$0xff]
        %v490 = vld [vmem:[%s197 + $0x8] sm:$0xff]
        %v491 = vld [vmem:[%s197 + $0x10] sm:$0xff]
        %v492 = vld [vmem:[%s197 + $0x18] sm:$0xff]
        %v493 = vld [vmem:[%s197 + $0x20] sm:$0xff]
        %v494 = vld [vmem:[%s197 + $0x28] sm:$0xff]
        %v495 = vld [vmem:[%s197 + $0x30] sm:$0xff]
        %v496 = vld [vmem:[%s197 + $0x38] sm:$0xff]
        %v497 = vld [vmem:[%s197 + $0x40] sm:$0xff]
        %v498 = vld [vmem:[%s197 + $0x48] sm:$0xff]
        %v499 = vld [vmem:[%s197 + $0x50] sm:$0xff]
        %v500 = vld [vmem:[%s197 + $0x58] sm:$0xff]
        %v501 = vld [vmem:[%s197 + $0x60] sm:$0xff]
        %v502 = vld [vmem:[%s197 + $0x68] sm:$0xff]
        %v503 = vld [vmem:[%s197 + $0x70] sm:$0xff]
        %v504 = vld [vmem:[%s197 + $0x78] sm:$0xff]
        %v505 = vld [vmem:[%s197 + $0x80] sm:$0xff]
        %v506 = vld [vmem:[%s197 + $0x88] sm:$0xff]
        %v507 = vld [vmem:[%s197 + $0x90] sm:$0xff]
        %v508 = vld [vmem:[%s197 + $0x98] sm:$0xff]
        %v509 = vld [vmem:[%s197 + $0xa0] sm:$0xff]
        %v510 = vld [vmem:[%s197 + $0xa8] sm:$0xff]
        %v511 = vld [vmem:[%s197 + $0xb0] sm:$0xff]
        %v512 = vld [vmem:[%s197 + $0xb8] sm:$0xff]
        %v513 = vld [vmem:[%s197 + $0xc0] sm:$0xff]
        %v514 = vld [vmem:[%s197 + $0xc8] sm:$0xff]
        %v515 = vld [vmem:[%s197 + $0xd0] sm:$0xff]
        %v516 = vld [vmem:[%s197 + $0xd8] sm:$0xff]
        %v517 = vld [vmem:[%s197 + $0xe0] sm:$0xff]
        %v518 = vld [vmem:[%s197 + $0xe8] sm:$0xff]
        %v519 = vld [vmem:[%s197 + $0xf0] sm:$0xff]
        %v520 = vld [vmem:[%s197 + $0xf8] sm:$0xff]
        %v521 = vld [vmem:[%s197 + $0x100] sm:$0xff]
        %v522 = vld [vmem:[%s197 + $0x108] sm:$0xff]
        %v523 = vld [vmem:[%s197 + $0x110] sm:$0xff]
        %v524 = vld [vmem:[%s197 + $0x118] sm:$0xff]
        %v525 = vld [vmem:[%s197 + $0x120] sm:$0xff]
        %v526 = vld [vmem:[%s197 + $0x128] sm:$0xff]
        %v527 = vld [vmem:[%s197 + $0x130] sm:$0xff]
        %v528 = vld [vmem:[%s197 + $0x138] sm:$0xff]
        %v529 = vld [vmem:[%s197 + $0x140] sm:$0xff]
        %v530 = vld [vmem:[%s197 + $0x148] sm:$0xff]
        %v531 = vld [vmem:[%s197 + $0x150] sm:$0xff]
        %v532 = vld [vmem:[%s197 + $0x158] sm:$0xff]
        %v533 = vld [vmem:[%s197 + $0x160] sm:$0xff]
        %v534 = vld [vmem:[%s197 + $0x168] sm:$0xff]
        %v535 = vld [vmem:[%s197 + $0x170] sm:$0xff]
        %v536 = vld [vmem:[%s197 + $0x178] sm:$0xff]
        %v537 = vld [vmem:[%s197 + $0x180] sm:$0xff]
        %v538 = vld [vmem:[%s197 + $0x188] sm:$0xff]
        %v539 = vld [vmem:[%s197 + $0x190] sm:$0xff]
        %v540 = vld [vmem:[%s197 + $0x198] sm:$0xff]
        %v541 = vld [vmem:[%s197 + $0x1a0] sm:$0xff]
        %v542 = vld [vmem:[%s197 + $0x1a8] sm:$0xff]
        %v543 = vld [vmem:[%s197 + $0x1b0] sm:$0xff]
        %v544 = vld [vmem:[%s197 + $0x1b8] sm:$0xff]
        %v545 = vld [vmem:[%s197 + $0x1c0] sm:$0xff]
        %v546 = vld [vmem:[%s197 + $0x1c8] sm:$0xff]
        %v547 = vld [vmem:[%s197 + $0x1d0] sm:$0xff]
        %v548 = vld [vmem:[%s197 + $0x1d8] sm:$0xff]
        %v549 = vld [vmem:[%s197 + $0x1e0] sm:$0xff]
        %v550 = vld [vmem:[%s197 + $0x1e8] sm:$0xff]
        %v551 = vld [vmem:[%s197 + $0x1f0] sm:$0xff]
        %v552 = vld [vmem:[%s197 + $0x1f8] sm:$0xff]
        %v553 = vld [vmem:[%s197 + $0x200] sm:$0xff]
        %v554 = vld [vmem:[%s197 + $0x208] sm:$0xff]
        %v555 = vld [vmem:[%s197 + $0x210] sm:$0xff]
        %v556 = vld [vmem:[%s197 + $0x218] sm:$0xff]
        %v557 = vld [vmem:[%s197 + $0x220] sm:$0xff]
        %v558 = vld [vmem:[%s197 + $0x228] sm:$0xff]
        %v559 = vld [vmem:[%s197 + $0x230] sm:$0xff]
        %v560 = vld [vmem:[%s197 + $0x238] sm:$0xff]
        %v561 = vld [vmem:[%s197 + $0x240] sm:$0xff]
        %v562 = vld [vmem:[%s197 + $0x248] sm:$0xff]
        %v563 = vld [vmem:[%s197 + $0x250] sm:$0xff]
        %v564 = vld [vmem:[%s197 + $0x258] sm:$0xff]
        %v565 = vld [vmem:[%s197 + $0x260] sm:$0xff]
        %v566 = vld [vmem:[%s197 + $0x268] sm:$0xff]
        %v567 = vld [vmem:[%s197 + $0x270] sm:$0xff]
        %v568 = vld [vmem:[%s197 + $0x278] sm:$0xff]
        %v569 = vld [vmem:[%s197 + $0x280] sm:$0xff]
        %v570 = vld [vmem:[%s197 + $0x288] sm:$0xff]
        %v571 = vld [vmem:[%s197 + $0x290] sm:$0xff]
        %v572 = vld [vmem:[%s197 + $0x298] sm:$0xff]
        %v573 = vld [vmem:[%s197 + $0x2a0] sm:$0xff]
        %v574 = vld [vmem:[%s197 + $0x2a8] sm:$0xff]
        %v575 = vld [vmem:[%s197 + $0x2b0] sm:$0xff]
        %v576 = vld [vmem:[%s197 + $0x2b8] sm:$0xff]
        %v577 = vld [vmem:[%s197 + $0x2c0] sm:$0xff]
        %v578 = vld [vmem:[%s197 + $0x2c8] sm:$0xff]
        %v579 = vld [vmem:[%s197 + $0x2d0] sm:$0xff]
        %v580 = vld [vmem:[%s197 + $0x2d8] sm:$0xff]
        %v581 = vld [vmem:[%s197 + $0x2e0] sm:$0xff]
        %v582 = vld [vmem:[%s197 + $0x2e8] sm:$0xff]
        %v583 = vld [vmem:[%s197 + $0x2f0] sm:$0xff]
        %v584 = vld [vmem:[%s197 + $0x2f8] sm:$0xff]
        %v585 = vld [vmem:[%s197 + $0x300] sm:$0xff]
        %v586 = vld [vmem:[%s197 + $0x308] sm:$0xff]
        %v587 = vld [vmem:[%s197 + $0x310] sm:$0xff]
        %v588 = vld [vmem:[%s197 + $0x318] sm:$0xff]
        %v589 = vld [vmem:[%s197 + $0x320] sm:$0xff]
        %v590 = vld [vmem:[%s197 + $0x328] sm:$0xff]
        %v591 = vld [vmem:[%s197 + $0x330] sm:$0xff]
        %v592 = vld [vmem:[%s197 + $0x338] sm:$0xff]
        %v593 = vld [vmem:[%s197 + $0x340] sm:$0xff]
        %v594 = vld [vmem:[%s197 + $0x348] sm:$0xff]
        %v595 = vld [vmem:[%s197 + $0x350] sm:$0xff]
        %v596 = vld [vmem:[%s197 + $0x358] sm:$0xff]
        %v597 = vld [vmem:[%s197 + $0x360] sm:$0xff]
        %v598 = vld [vmem:[%s197 + $0x368] sm:$0xff]
        %v599 = vld [vmem:[%s197 + $0x370] sm:$0xff]
        %v600 = vld [vmem:[%s197 + $0x378] sm:$0xff]
        %v601 = vld [vmem:[%s197 + $0x380] sm:$0xff]
        %v602 = vld [vmem:[%s197 + $0x388] sm:$0xff]
        %v603 = vld [vmem:[%s197 + $0x390] sm:$0xff]
        %v604 = vld [vmem:[%s197 + $0x398] sm:$0xff]
        %v605 = vld [vmem:[%s197 + $0x3a0] sm:$0xff]
        %v606 = vld [vmem:[%s197 + $0x3a8] sm:$0xff]
        %v607 = vld [vmem:[%s197 + $0x3b0] sm:$0xff]
        %v608 = vld [vmem:[%s197 + $0x3b8] sm:$0xff]
        %v609 = vld [vmem:[%s197 + $0x3c0] sm:$0xff]
        %v610 = vld [vmem:[%s197 + $0x3c8] sm:$0xff]
        %v611 = vld [vmem:[%s197 + $0x3d0] sm:$0xff]
        %v612 = vld [vmem:[%s197 + $0x3d8] sm:$0xff]
        %v613 = vld [vmem:[%s197 + $0x3e0] sm:$0xff]
        %v614 = vld [vmem:[%s197 + $0x3e8] sm:$0xff]
        %v615 = vld [vmem:[%s197 + $0x3f0] sm:$0xff]
        %v616 = vld [vmem:[%s197 + $0x3f8] sm:$0xff]
        %v617 = vld [vmem:[%s197 + $0x400] sm:$0xff]
        %v618 = vld [vmem:[%s197 + $0x408] sm:$0xff]
        %v619 = vld [vmem:[%s197 + $0x410] sm:$0xff]
        %v620 = vld [vmem:[%s197 + $0x418] sm:$0xff]
        %v621 = vld [vmem:[%s197 + $0x420] sm:$0xff]
        %v622 = vld [vmem:[%s197 + $0x428] sm:$0xff]
        %v623 = vld [vmem:[%s197 + $0x430] sm:$0xff]
        %v624 = vld [vmem:[%s197 + $0x438] sm:$0xff]
        %v625 = vld [vmem:[%s197 + $0x440] sm:$0xff]
        %v626 = vld [vmem:[%s197 + $0x448] sm:$0xff]
        %v627 = vld [vmem:[%s197 + $0x450] sm:$0xff]
        %v628 = vld [vmem:[%s197 + $0x458] sm:$0xff]
        %v629 = vld [vmem:[%s197 + $0x460] sm:$0xff]
        %v630 = vld [vmem:[%s197 + $0x468] sm:$0xff]
        %v631 = vld [vmem:[%s197 + $0x470] sm:$0xff]
        %v632 = vld [vmem:[%s197 + $0x478] sm:$0xff]
        %v633 = vld [vmem:[%s197 + $0x480] sm:$0xff]
        %v634 = vld [vmem:[%s197 + $0x488] sm:$0xff]
        %v635 = vld [vmem:[%s197 + $0x490] sm:$0xff]
        %v636 = vld [vmem:[%s197 + $0x498] sm:$0xff]
        %v637 = vld [vmem:[%s197 + $0x4a0] sm:$0xff]
        %v638 = vld [vmem:[%s197 + $0x4a8] sm:$0xff]
        %v639 = vld [vmem:[%s197 + $0x4b0] sm:$0xff]
        %v640 = vld [vmem:[%s197 + $0x4b8] sm:$0xff]
        %v641 = vld [vmem:[%s197 + $0x4c0] sm:$0xff]
        %v642 = vld [vmem:[%s197 + $0x4c8] sm:$0xff]
        %v643 = vld [vmem:[%s197 + $0x4d0] sm:$0xff]
        %v644 = vld [vmem:[%s197 + $0x4d8] sm:$0xff]
        %v645 = vld [vmem:[%s197 + $0x4e0] sm:$0xff]
        %v646 = vld [vmem:[%s197 + $0x4e8] sm:$0xff]
        %v647 = vld [vmem:[%s197 + $0x4f0] sm:$0xff]
        %v648 = vld [vmem:[%s197 + $0x4f8] sm:$0xff]
        %v649 = vld [vmem:[%s197 + $0x500] sm:$0xff]
        %v650 = vld [vmem:[%s197 + $0x508] sm:$0xff]
        %v651 = vld [vmem:[%s197 + $0x510] sm:$0xff]
        %v652 = vld [vmem:[%s197 + $0x518] sm:$0xff]
        %v653 = vld [vmem:[%s197 + $0x520] sm:$0xff]
        %v654 = vld [vmem:[%s197 + $0x528] sm:$0xff]
        %v655 = vld [vmem:[%s197 + $0x530] sm:$0xff]
        %v656 = vld [vmem:[%s197 + $0x538] sm:$0xff]
        %v657 = vld [vmem:[%s197 + $0x540] sm:$0xff]
        %v658 = vld [vmem:[%s197 + $0x548] sm:$0xff]
        %v659 = vld [vmem:[%s197 + $0x550] sm:$0xff]
        %v660 = vld [vmem:[%s197 + $0x558] sm:$0xff]
        %v661 = vld [vmem:[%s197 + $0x560] sm:$0xff]
        %v662 = vld [vmem:[%s197 + $0x568] sm:$0xff]
        %v663 = vld [vmem:[%s197 + $0x570] sm:$0xff]
        %v664 = vld [vmem:[%s197 + $0x578] sm:$0xff]
        %v665 = vld [vmem:[%s197 + $0x580] sm:$0xff]
        %v666 = vld [vmem:[%s197 + $0x588] sm:$0xff]
        %v667 = vld [vmem:[%s197 + $0x590] sm:$0xff]
        %v668 = vld [vmem:[%s197 + $0x598] sm:$0xff]
        %v669 = vld [vmem:[%s197 + $0x5a0] sm:$0xff]
        %v670 = vld [vmem:[%s197 + $0x5a8] sm:$0xff]
        %v671 = vld [vmem:[%s197 + $0x5b0] sm:$0xff]
        %v672 = vld [vmem:[%s197 + $0x5b8] sm:$0xff]
        %v673 = vld [vmem:[%s197 + $0x5c0] sm:$0xff]
        %v674 = vld [vmem:[%s197 + $0x5c8] sm:$0xff]
        %v675 = vld [vmem:[%s197 + $0x5d0] sm:$0xff]
        %v676 = vld [vmem:[%s197 + $0x5d8] sm:$0xff]
        %v677 = vld [vmem:[%s197 + $0x5e0] sm:$0xff]
        %v678 = vld [vmem:[%s197 + $0x5e8] sm:$0xff]
        %v679 = vld [vmem:[%s197 + $0x5f0] sm:$0xff]
        %v680 = vld [vmem:[%s197 + $0x5f8] sm:$0xff]
        %v681 = vld [vmem:[%s197 + $0x600] sm:$0xff]
        %v682 = vld [vmem:[%s197 + $0x608] sm:$0xff]
        %v683 = vld [vmem:[%s197 + $0x610] sm:$0xff]
        %v684 = vld [vmem:[%s197 + $0x618] sm:$0xff]
        %v685 = vld [vmem:[%s197 + $0x620] sm:$0xff]
        %v686 = vld [vmem:[%s197 + $0x628] sm:$0xff]
        %v687 = vld [vmem:[%s197 + $0x630] sm:$0xff]
        %v688 = vld [vmem:[%s197 + $0x638] sm:$0xff]
        %v689 = vld [vmem:[%s197 + $0x640] sm:$0xff]
        %v690 = vld [vmem:[%s197 + $0x648] sm:$0xff]
        %v691 = vld [vmem:[%s197 + $0x650] sm:$0xff]
        %v692 = vld [vmem:[%s197 + $0x658] sm:$0xff]
        %v693 = vld [vmem:[%s197 + $0x660] sm:$0xff]
        %v694 = vld [vmem:[%s197 + $0x668] sm:$0xff]
        %v695 = vld [vmem:[%s197 + $0x670] sm:$0xff]
        %v696 = vld [vmem:[%s197 + $0x678] sm:$0xff]
        %v697 = vld [vmem:[%s197 + $0x680] sm:$0xff]
        %v698 = vld [vmem:[%s197 + $0x688] sm:$0xff]
        %v699 = vld [vmem:[%s197 + $0x690] sm:$0xff]
        %v700 = vld [vmem:[%s197 + $0x698] sm:$0xff]
        %v701 = vld [vmem:[%s197 + $0x6a0] sm:$0xff]
        %v702 = vld [vmem:[%s197 + $0x6a8] sm:$0xff]
        %v703 = vld [vmem:[%s197 + $0x6b0] sm:$0xff]
        %v704 = vld [vmem:[%s197 + $0x6b8] sm:$0xff]
        %v705 = vld [vmem:[%s197 + $0x6c0] sm:$0xff]
        %v706 = vld [vmem:[%s197 + $0x6c8] sm:$0xff]
        %v707 = vld [vmem:[%s197 + $0x6d0] sm:$0xff]
        %v708 = vld [vmem:[%s197 + $0x6d8] sm:$0xff]
        %v709 = vld [vmem:[%s197 + $0x6e0] sm:$0xff]
        %v710 = vld [vmem:[%s197 + $0x6e8] sm:$0xff]
        %v711 = vld [vmem:[%s197 + $0x6f0] sm:$0xff]
        %v712 = vld [vmem:[%s197 + $0x6f8] sm:$0xff]
        %v713 = vld [vmem:[%s197 + $0x700] sm:$0xff]
        %v714 = vld [vmem:[%s197 + $0x708] sm:$0xff]
        %v715 = vld [vmem:[%s197 + $0x710] sm:$0xff]
        %v716 = vld [vmem:[%s197 + $0x718] sm:$0xff]
        %v717 = vld [vmem:[%s197 + $0x720] sm:$0xff]
        %v718 = vld [vmem:[%s197 + $0x728] sm:$0xff]
        %v719 = vld [vmem:[%s197 + $0x730] sm:$0xff]
        %v720 = vld [vmem:[%s197 + $0x738] sm:$0xff]
        %v721 = vld [vmem:[%s197 + $0x740] sm:$0xff]
        %v722 = vld [vmem:[%s197 + $0x748] sm:$0xff]
        %v723 = vld [vmem:[%s197 + $0x750] sm:$0xff]
        %v724 = vld [vmem:[%s197 + $0x758] sm:$0xff]
        %v725 = vld [vmem:[%s197 + $0x760] sm:$0xff]
        %v726 = vld [vmem:[%s197 + $0x768] sm:$0xff]
        %v727 = vld [vmem:[%s197 + $0x770] sm:$0xff]
        %v728 = vld [vmem:[%s197 + $0x778] sm:$0xff]
        %v729 = vld [vmem:[%s197 + $0x780] sm:$0xff]
        %v730 = vld [vmem:[%s197 + $0x788] sm:$0xff]
        %v731 = vld [vmem:[%s197 + $0x790] sm:$0xff]
        %v732 = vld [vmem:[%s197 + $0x798] sm:$0xff]
        %v733 = vld [vmem:[%s197 + $0x7a0] sm:$0xff]
        %v734 = vld [vmem:[%s197 + $0x7a8] sm:$0xff]
        %v735 = vld [vmem:[%s197 + $0x7b0] sm:$0xff]
        %v736 = vld [vmem:[%s197 + $0x7b8] sm:$0xff]
        %v737 = vld [vmem:[%s197 + $0x7c0] sm:$0xff]
        %v738 = vld [vmem:[%s197 + $0x7c8] sm:$0xff]
        %v739 = vld [vmem:[%s197 + $0x7d0] sm:$0xff]
        %v740 = vld [vmem:[%s197 + $0x7d8] sm:$0xff]
        %v741 = vld [vmem:[%s197 + $0x7e0] sm:$0xff]
        %v742 = vld [vmem:[%s197 + $0x7e8] sm:$0xff]
        %v743 = vld [vmem:[%s197 + $0x7f0] sm:$0xff]
        %v744 = vld [vmem:[%s197 + $0x7f8] sm:$0xff]
        %v745 = vsub.f32 %v233, %v489
        %v746 = vsub.f32 %v234, %v490
        %v747 = vsub.f32 %v235, %v491
        %v748 = vsub.f32 %v236, %v492
        %v749 = vsub.f32 %v237, %v493
        %v750 = vsub.f32 %v238, %v494
        %v751 = vsub.f32 %v239, %v495
        %v752 = vsub.f32 %v240, %v496
        %v753 = vsub.f32 %v241, %v497
        %v754 = vsub.f32 %v242, %v498
        %v755 = vsub.f32 %v243, %v499
        %v756 = vsub.f32 %v244, %v500
        %v757 = vsub.f32 %v245, %v501
        %v758 = vsub.f32 %v246, %v502
        %v759 = vsub.f32 %v247, %v503
        %v760 = vsub.f32 %v248, %v504
        %v761 = vsub.f32 %v249, %v505
        %v762 = vsub.f32 %v250, %v506
        %v763 = vsub.f32 %v251, %v507
        %v764 = vsub.f32 %v252, %v508
        %v765 = vsub.f32 %v253, %v509
        %v766 = vsub.f32 %v254, %v510
        %v767 = vsub.f32 %v255, %v511
        %v768 = vsub.f32 %v256, %v512
        %v769 = vsub.f32 %v257, %v513
        %v770 = vsub.f32 %v258, %v514
        %v771 = vsub.f32 %v259, %v515
        %v772 = vsub.f32 %v260, %v516
        %v773 = vsub.f32 %v261, %v517
        %v774 = vsub.f32 %v262, %v518
        %v775 = vsub.f32 %v263, %v519
        %v776 = vsub.f32 %v264, %v520
        %v777 = vsub.f32 %v265, %v521
        %v778 = vsub.f32 %v266, %v522
        %v779 = vsub.f32 %v267, %v523
        %v780 = vsub.f32 %v268, %v524
        %v781 = vsub.f32 %v269, %v525
        %v782 = vsub.f32 %v270, %v526
        %v783 = vsub.f32 %v271, %v527
        %v784 = vsub.f32 %v272, %v528
        %v785 = vsub.f32 %v273, %v529
        %v786 = vsub.f32 %v274, %v530
        %v787 = vsub.f32 %v275, %v531
        %v788 = vsub.f32 %v276, %v532
        %v789 = vsub.f32 %v277, %v533
        %v790 = vsub.f32 %v278, %v534
        %v791 = vsub.f32 %v279, %v535
        %v792 = vsub.f32 %v280, %v536
        %v793 = vsub.f32 %v281, %v537
        %v794 = vsub.f32 %v282, %v538
        %v795 = vsub.f32 %v283, %v539
        %v796 = vsub.f32 %v284, %v540
        %v797 = vsub.f32 %v285, %v541
        %v798 = vsub.f32 %v286, %v542
        %v799 = vsub.f32 %v287, %v543
        %v800 = vsub.f32 %v288, %v544
        %v801 = vsub.f32 %v289, %v545
        %v802 = vsub.f32 %v290, %v546
        %v803 = vsub.f32 %v291, %v547
        %v804 = vsub.f32 %v292, %v548
        %v805 = vsub.f32 %v293, %v549
        %v806 = vsub.f32 %v294, %v550
        %v807 = vsub.f32 %v295, %v551
        %v808 = vsub.f32 %v296, %v552
        %v809 = vsub.f32 %v297, %v553
        %v810 = vsub.f32 %v298, %v554
        %v811 = vsub.f32 %v299, %v555
        %v812 = vsub.f32 %v300, %v556
        %v813 = vsub.f32 %v301, %v557
        %v814 = vsub.f32 %v302, %v558
        %v815 = vsub.f32 %v303, %v559
        %v816 = vsub.f32 %v304, %v560
        %v817 = vsub.f32 %v305, %v561
        %v818 = vsub.f32 %v306, %v562
        %v819 = vsub.f32 %v307, %v563
        %v820 = vsub.f32 %v308, %v564
        %v821 = vsub.f32 %v309, %v565
        %v822 = vsub.f32 %v310, %v566
        %v823 = vsub.f32 %v311, %v567
        %v824 = vsub.f32 %v312, %v568
        %v825 = vsub.f32 %v313, %v569
        %v826 = vsub.f32 %v314, %v570
        %v827 = vsub.f32 %v315, %v571
        %v828 = vsub.f32 %v316, %v572
        %v829 = vsub.f32 %v317, %v573
        %v830 = vsub.f32 %v318, %v574
        %v831 = vsub.f32 %v319, %v575
        %v832 = vsub.f32 %v320, %v576
        %v833 = vsub.f32 %v321, %v577
        %v834 = vsub.f32 %v322, %v578
        %v835 = vsub.f32 %v323, %v579
        %v836 = vsub.f32 %v324, %v580
        %v837 = vsub.f32 %v325, %v581
        %v838 = vsub.f32 %v326, %v582
        %v839 = vsub.f32 %v327, %v583
        %v840 = vsub.f32 %v328, %v584
        %v841 = vsub.f32 %v329, %v585
        %v842 = vsub.f32 %v330, %v586
        %v843 = vsub.f32 %v331, %v587
        %v844 = vsub.f32 %v332, %v588
        %v845 = vsub.f32 %v333, %v589
        %v846 = vsub.f32 %v334, %v590
        %v847 = vsub.f32 %v335, %v591
        %v848 = vsub.f32 %v336, %v592
        %v849 = vsub.f32 %v337, %v593
        %v850 = vsub.f32 %v338, %v594
        %v851 = vsub.f32 %v339, %v595
        %v852 = vsub.f32 %v340, %v596
        %v853 = vsub.f32 %v341, %v597
        %v854 = vsub.f32 %v342, %v598
        %v855 = vsub.f32 %v343, %v599
        %v856 = vsub.f32 %v344, %v600
        %v857 = vsub.f32 %v345, %v601
        %v858 = vsub.f32 %v346, %v602
        %v859 = vsub.f32 %v347, %v603
        %v860 = vsub.f32 %v348, %v604
        %v861 = vsub.f32 %v349, %v605
        %v862 = vsub.f32 %v350, %v606
        %v863 = vsub.f32 %v351, %v607
        %v864 = vsub.f32 %v352, %v608
        %v865 = vsub.f32 %v353, %v609
        %v866 = vsub.f32 %v354, %v610
        %v867 = vsub.f32 %v355, %v611
        %v868 = vsub.f32 %v356, %v612
        %v869 = vsub.f32 %v357, %v613
        %v870 = vsub.f32 %v358, %v614
        %v871 = vsub.f32 %v359, %v615
        %v872 = vsub.f32 %v360, %v616
        %v873 = vsub.f32 %v361, %v617
        %v874 = vsub.f32 %v362, %v618
        %v875 = vsub.f32 %v363, %v619
        %v876 = vsub.f32 %v364, %v620
        %v877 = vsub.f32 %v365, %v621
        %v878 = vsub.f32 %v366, %v622
        %v879 = vsub.f32 %v367, %v623
        %v880 = vsub.f32 %v368, %v624
        %v881 = vsub.f32 %v369, %v625
        %v882 = vsub.f32 %v370, %v626
        %v883 = vsub.f32 %v371, %v627
        %v884 = vsub.f32 %v372, %v628
        %v885 = vsub.f32 %v373, %v629
        %v886 = vsub.f32 %v374, %v630
        %v887 = vsub.f32 %v375, %v631
        %v888 = vsub.f32 %v376, %v632
        %v889 = vsub.f32 %v377, %v633
        %v890 = vsub.f32 %v378, %v634
        %v891 = vsub.f32 %v379, %v635
        %v892 = vsub.f32 %v380, %v636
        %v893 = vsub.f32 %v381, %v637
        %v894 = vsub.f32 %v382, %v638
        %v895 = vsub.f32 %v383, %v639
        %v896 = vsub.f32 %v384, %v640
        %v897 = vsub.f32 %v385, %v641
        %v898 = vsub.f32 %v386, %v642
        %v899 = vsub.f32 %v387, %v643
        %v900 = vsub.f32 %v388, %v644
        %v901 = vsub.f32 %v389, %v645
        %v902 = vsub.f32 %v390, %v646
        %v903 = vsub.f32 %v391, %v647
        %v904 = vsub.f32 %v392, %v648
        %v905 = vsub.f32 %v393, %v649
        %v906 = vsub.f32 %v394, %v650
        %v907 = vsub.f32 %v395, %v651
        %v908 = vsub.f32 %v396, %v652
        %v909 = vsub.f32 %v397, %v653
        %v910 = vsub.f32 %v398, %v654
        %v911 = vsub.f32 %v399, %v655
        %v912 = vsub.f32 %v400, %v656
        %v913 = vsub.f32 %v401, %v657
        %v914 = vsub.f32 %v402, %v658
        %v915 = vsub.f32 %v403, %v659
        %v916 = vsub.f32 %v404, %v660
        %v917 = vsub.f32 %v405, %v661
        %v918 = vsub.f32 %v406, %v662
        %v919 = vsub.f32 %v407, %v663
        %v920 = vsub.f32 %v408, %v664
        %v921 = vsub.f32 %v409, %v665
        %v922 = vsub.f32 %v410, %v666
        %v923 = vsub.f32 %v411, %v667
        %v924 = vsub.f32 %v412, %v668
        %v925 = vsub.f32 %v413, %v669
        %v926 = vsub.f32 %v414, %v670
        %v927 = vsub.f32 %v415, %v671
        %v928 = vsub.f32 %v416, %v672
        %v929 = vsub.f32 %v417, %v673
        %v930 = vsub.f32 %v418, %v674
        %v931 = vsub.f32 %v419, %v675
        %v932 = vsub.f32 %v420, %v676
        %v933 = vsub.f32 %v421, %v677
        %v934 = vsub.f32 %v422, %v678
        %v935 = vsub.f32 %v423, %v679
        %v936 = vsub.f32 %v424, %v680
        %v937 = vsub.f32 %v425, %v681
        %v938 = vsub.f32 %v426, %v682
        %v939 = vsub.f32 %v427, %v683
        %v940 = vsub.f32 %v428, %v684
        %v941 = vsub.f32 %v429, %v685
        %v942 = vsub.f32 %v430, %v686
        %v943 = vsub.f32 %v431, %v687
        %v944 = vsub.f32 %v432, %v688
        %v945 = vsub.f32 %v433, %v689
        %v946 = vsub.f32 %v434, %v690
        %v947 = vsub.f32 %v435, %v691
        %v948 = vsub.f32 %v436, %v692
        %v949 = vsub.f32 %v437, %v693
        %v950 = vsub.f32 %v438, %v694
        %v951 = vsub.f32 %v439, %v695
        %v952 = vsub.f32 %v440, %v696
        %v953 = vsub.f32 %v441, %v697
        %v954 = vsub.f32 %v442, %v698
        %v955 = vsub.f32 %v443, %v699
        %v956 = vsub.f32 %v444, %v700
        %v957 = vsub.f32 %v445, %v701
        %v958 = vsub.f32 %v446, %v702
        %v959 = vsub.f32 %v447, %v703
        %v960 = vsub.f32 %v448, %v704
        %v961 = vsub.f32 %v449, %v705
        %v962 = vsub.f32 %v450, %v706
        %v963 = vsub.f32 %v451, %v707
        %v964 = vsub.f32 %v452, %v708
        %v965 = vsub.f32 %v453, %v709
        %v966 = vsub.f32 %v454, %v710
        %v967 = vsub.f32 %v455, %v711
        %v968 = vsub.f32 %v456, %v712
        %v969 = vsub.f32 %v457, %v713
        %v970 = vsub.f32 %v458, %v714
        %v971 = vsub.f32 %v459, %v715
        %v972 = vsub.f32 %v460, %v716
        %v973 = vsub.f32 %v461, %v717
        %v974 = vsub.f32 %v462, %v718
        %v975 = vsub.f32 %v463, %v719
        %v976 = vsub.f32 %v464, %v720
        %v977 = vsub.f32 %v465, %v721
        %v978 = vsub.f32 %v466, %v722
        %v979 = vsub.f32 %v467, %v723
        %v980 = vsub.f32 %v468, %v724
        %v981 = vsub.f32 %v469, %v725
        %v982 = vsub.f32 %v470, %v726
        %v983 = vsub.f32 %v471, %v727
        %v984 = vsub.f32 %v472, %v728
        %v985 = vsub.f32 %v473, %v729
        %v986 = vsub.f32 %v474, %v730
        %v987 = vsub.f32 %v475, %v731
        %v988 = vsub.f32 %v476, %v732
        %v989 = vsub.f32 %v477, %v733
        %v990 = vsub.f32 %v478, %v734
        %v991 = vsub.f32 %v479, %v735
        %v992 = vsub.f32 %v480, %v736
        %v993 = vsub.f32 %v481, %v737
        %v994 = vsub.f32 %v482, %v738
        %v995 = vsub.f32 %v483, %v739
        %v996 = vsub.f32 %v484, %v740
        %v997 = vsub.f32 %v485, %v741
        %v998 = vsub.f32 %v486, %v742
        %v999 = vsub.f32 %v487, %v743
        %v1000 = vsub.f32 %v488, %v744
        %v1001 = vmul.f32 %v745, %v745
        %v1002 = vmul.f32 %v746, %v746
        %v1003 = vmul.f32 %v747, %v747
        %v1004 = vmul.f32 %v748, %v748
        %v1005 = vmul.f32 %v749, %v749
        %v1006 = vmul.f32 %v750, %v750
        %v1007 = vmul.f32 %v751, %v751
        %v1008 = vmul.f32 %v752, %v752
        %v1009 = vmul.f32 %v753, %v753
        %v1010 = vmul.f32 %v754, %v754
        %v1011 = vmul.f32 %v755, %v755
        %v1012 = vmul.f32 %v756, %v756
        %v1013 = vmul.f32 %v757, %v757
        %v1014 = vmul.f32 %v758, %v758
        %v1015 = vmul.f32 %v759, %v759
        %v1016 = vmul.f32 %v760, %v760
        %v1017 = vmul.f32 %v761, %v761
        %v1018 = vmul.f32 %v762, %v762
        %v1019 = vmul.f32 %v763, %v763
        %v1020 = vmul.f32 %v764, %v764
        %v1021 = vmul.f32 %v765, %v765
        %v1022 = vmul.f32 %v766, %v766
        %v1023 = vmul.f32 %v767, %v767
        %v1024 = vmul.f32 %v768, %v768
        %v1025 = vmul.f32 %v769, %v769
        %v1026 = vmul.f32 %v770, %v770
        %v1027 = vmul.f32 %v771, %v771
        %v1028 = vmul.f32 %v772, %v772
        %v1029 = vmul.f32 %v773, %v773
        %v1030 = vmul.f32 %v774, %v774
        %v1031 = vmul.f32 %v775, %v775
        %v1032 = vmul.f32 %v776, %v776
        %v1033 = vmul.f32 %v777, %v777
        %v1034 = vmul.f32 %v778, %v778
        %v1035 = vmul.f32 %v779, %v779
        %v1036 = vmul.f32 %v780, %v780
        %v1037 = vmul.f32 %v781, %v781
        %v1038 = vmul.f32 %v782, %v782
        %v1039 = vmul.f32 %v783, %v783
        %v1040 = vmul.f32 %v784, %v784
        %v1041 = vmul.f32 %v785, %v785
        %v1042 = vmul.f32 %v786, %v786
        %v1043 = vmul.f32 %v787, %v787
        %v1044 = vmul.f32 %v788, %v788
        %v1045 = vmul.f32 %v789, %v789
        %v1046 = vmul.f32 %v790, %v790
        %v1047 = vmul.f32 %v791, %v791
        %v1048 = vmul.f32 %v792, %v792
        %v1049 = vmul.f32 %v793, %v793
        %v1050 = vmul.f32 %v794, %v794
        %v1051 = vmul.f32 %v795, %v795
        %v1052 = vmul.f32 %v796, %v796
        %v1053 = vmul.f32 %v797, %v797
        %v1054 = vmul.f32 %v798, %v798
        %v1055 = vmul.f32 %v799, %v799
        %v1056 = vmul.f32 %v800, %v800
        %v1057 = vmul.f32 %v801, %v801
        %v1058 = vmul.f32 %v802, %v802
        %v1059 = vmul.f32 %v803, %v803
        %v1060 = vmul.f32 %v804, %v804
        %v1061 = vmul.f32 %v805, %v805
        %v1062 = vmul.f32 %v806, %v806
        %v1063 = vmul.f32 %v807, %v807
        %v1064 = vmul.f32 %v808, %v808
        %v1065 = vmul.f32 %v809, %v809
        %v1066 = vmul.f32 %v810, %v810
        %v1067 = vmul.f32 %v811, %v811
        %v1068 = vmul.f32 %v812, %v812
        %v1069 = vmul.f32 %v813, %v813
        %v1070 = vmul.f32 %v814, %v814
        %v1071 = vmul.f32 %v815, %v815
        %v1072 = vmul.f32 %v816, %v816
        %v1073 = vmul.f32 %v817, %v817
        %v1074 = vmul.f32 %v818, %v818
        %v1075 = vmul.f32 %v819, %v819
        %v1076 = vmul.f32 %v820, %v820
        %v1077 = vmul.f32 %v821, %v821
        %v1078 = vmul.f32 %v822, %v822
        %v1079 = vmul.f32 %v823, %v823
        %v1080 = vmul.f32 %v824, %v824
        %v1081 = vmul.f32 %v825, %v825
        %v1082 = vmul.f32 %v826, %v826
        %v1083 = vmul.f32 %v827, %v827
        %v1084 = vmul.f32 %v828, %v828
        %v1085 = vmul.f32 %v829, %v829
        %v1086 = vmul.f32 %v830, %v830
        %v1087 = vmul.f32 %v831, %v831
        %v1088 = vmul.f32 %v832, %v832
        %v1089 = vmul.f32 %v833, %v833
        %v1090 = vmul.f32 %v834, %v834
        %v1091 = vmul.f32 %v835, %v835
        %v1092 = vmul.f32 %v836, %v836
        %v1093 = vmul.f32 %v837, %v837
        %v1094 = vmul.f32 %v838, %v838
        %v1095 = vmul.f32 %v839, %v839
        %v1096 = vmul.f32 %v840, %v840
        %v1097 = vmul.f32 %v841, %v841
        %v1098 = vmul.f32 %v842, %v842
        %v1099 = vmul.f32 %v843, %v843
        %v1100 = vmul.f32 %v844, %v844
        %v1101 = vmul.f32 %v845, %v845
        %v1102 = vmul.f32 %v846, %v846
        %v1103 = vmul.f32 %v847, %v847
        %v1104 = vmul.f32 %v848, %v848
        %v1105 = vmul.f32 %v849, %v849
        %v1106 = vmul.f32 %v850, %v850
        %v1107 = vmul.f32 %v851, %v851
        %v1108 = vmul.f32 %v852, %v852
        %v1109 = vmul.f32 %v853, %v853
        %v1110 = vmul.f32 %v854, %v854
        %v1111 = vmul.f32 %v855, %v855
        %v1112 = vmul.f32 %v856, %v856
        %v1113 = vmul.f32 %v857, %v857
        %v1114 = vmul.f32 %v858, %v858
        %v1115 = vmul.f32 %v859, %v859
        %v1116 = vmul.f32 %v860, %v860
        %v1117 = vmul.f32 %v861, %v861
        %v1118 = vmul.f32 %v862, %v862
        %v1119 = vmul.f32 %v863, %v863
        %v1120 = vmul.f32 %v864, %v864
        %v1121 = vmul.f32 %v865, %v865
        %v1122 = vmul.f32 %v866, %v866
        %v1123 = vmul.f32 %v867, %v867
        %v1124 = vmul.f32 %v868, %v868
        %v1125 = vmul.f32 %v869, %v869
        %v1126 = vmul.f32 %v870, %v870
        %v1127 = vmul.f32 %v871, %v871
        %v1128 = vmul.f32 %v872, %v872
        %v1129 = vmul.f32 %v873, %v873
        %v1130 = vmul.f32 %v874, %v874
        %v1131 = vmul.f32 %v875, %v875
        %v1132 = vmul.f32 %v876, %v876
        %v1133 = vmul.f32 %v877, %v877
        %v1134 = vmul.f32 %v878, %v878
        %v1135 = vmul.f32 %v879, %v879
        %v1136 = vmul.f32 %v880, %v880
        %v1137 = vmul.f32 %v881, %v881
        %v1138 = vmul.f32 %v882, %v882
        %v1139 = vmul.f32 %v883, %v883
        %v1140 = vmul.f32 %v884, %v884
        %v1141 = vmul.f32 %v885, %v885
        %v1142 = vmul.f32 %v886, %v886
        %v1143 = vmul.f32 %v887, %v887
        %v1144 = vmul.f32 %v888, %v888
        %v1145 = vmul.f32 %v889, %v889
        %v1146 = vmul.f32 %v890, %v890
        %v1147 = vmul.f32 %v891, %v891
        %v1148 = vmul.f32 %v892, %v892
        %v1149 = vmul.f32 %v893, %v893
        %v1150 = vmul.f32 %v894, %v894
        %v1151 = vmul.f32 %v895, %v895
        %v1152 = vmul.f32 %v896, %v896
        %v1153 = vmul.f32 %v897, %v897
        %v1154 = vmul.f32 %v898, %v898
        %v1155 = vmul.f32 %v899, %v899
        %v1156 = vmul.f32 %v900, %v900
        %v1157 = vmul.f32 %v901, %v901
        %v1158 = vmul.f32 %v902, %v902
        %v1159 = vmul.f32 %v903, %v903
        %v1160 = vmul.f32 %v904, %v904
        %v1161 = vmul.f32 %v905, %v905
        %v1162 = vmul.f32 %v906, %v906
        %v1163 = vmul.f32 %v907, %v907
        %v1164 = vmul.f32 %v908, %v908
        %v1165 = vmul.f32 %v909, %v909
        %v1166 = vmul.f32 %v910, %v910
        %v1167 = vmul.f32 %v911, %v911
        %v1168 = vmul.f32 %v912, %v912
        %v1169 = vmul.f32 %v913, %v913
        %v1170 = vmul.f32 %v914, %v914
        %v1171 = vmul.f32 %v915, %v915
        %v1172 = vmul.f32 %v916, %v916
        %v1173 = vmul.f32 %v917, %v917
        %v1174 = vmul.f32 %v918, %v918
        %v1175 = vmul.f32 %v919, %v919
        %v1176 = vmul.f32 %v920, %v920
        %v1177 = vmul.f32 %v921, %v921
        %v1178 = vmul.f32 %v922, %v922
        %v1179 = vmul.f32 %v923, %v923
        %v1180 = vmul.f32 %v924, %v924
        %v1181 = vmul.f32 %v925, %v925
        %v1182 = vmul.f32 %v926, %v926
        %v1183 = vmul.f32 %v927, %v927
        %v1184 = vmul.f32 %v928, %v928
        %v1185 = vmul.f32 %v929, %v929
        %v1186 = vmul.f32 %v930, %v930
        %v1187 = vmul.f32 %v931, %v931
        %v1188 = vmul.f32 %v932, %v932
        %v1189 = vmul.f32 %v933, %v933
        %v1190 = vmul.f32 %v934, %v934
        %v1191 = vmul.f32 %v935, %v935
        %v1192 = vmul.f32 %v936, %v936
        %v1193 = vmul.f32 %v937, %v937
        %v1194 = vmul.f32 %v938, %v938
        %v1195 = vmul.f32 %v939, %v939
        %v1196 = vmul.f32 %v940, %v940
        %v1197 = vmul.f32 %v941, %v941
        %v1198 = vmul.f32 %v942, %v942
        %v1199 = vmul.f32 %v943, %v943
        %v1200 = vmul.f32 %v944, %v944
        %v1201 = vmul.f32 %v945, %v945
        %v1202 = vmul.f32 %v946, %v946
        %v1203 = vmul.f32 %v947, %v947
        %v1204 = vmul.f32 %v948, %v948
        %v1205 = vmul.f32 %v949, %v949
        %v1206 = vmul.f32 %v950, %v950
        %v1207 = vmul.f32 %v951, %v951
        %v1208 = vmul.f32 %v952, %v952
        %v1209 = vmul.f32 %v953, %v953
        %v1210 = vmul.f32 %v954, %v954
        %v1211 = vmul.f32 %v955, %v955
        %v1212 = vmul.f32 %v956, %v956
        %v1213 = vmul.f32 %v957, %v957
        %v1214 = vmul.f32 %v958, %v958
        %v1215 = vmul.f32 %v959, %v959
        %v1216 = vmul.f32 %v960, %v960
        %v1217 = vmul.f32 %v961, %v961
        %v1218 = vmul.f32 %v962, %v962
        %v1219 = vmul.f32 %v963, %v963
        %v1220 = vmul.f32 %v964, %v964
        %v1221 = vmul.f32 %v965, %v965
        %v1222 = vmul.f32 %v966, %v966
        %v1223 = vmul.f32 %v967, %v967
        %v1224 = vmul.f32 %v968, %v968
        %v1225 = vmul.f32 %v969, %v969
        %v1226 = vmul.f32 %v970, %v970
        %v1227 = vmul.f32 %v971, %v971
        %v1228 = vmul.f32 %v972, %v972
        %v1229 = vmul.f32 %v973, %v973
        %v1230 = vmul.f32 %v974, %v974
        %v1231 = vmul.f32 %v975, %v975
        %v1232 = vmul.f32 %v976, %v976
        %v1233 = vmul.f32 %v977, %v977
        %v1234 = vmul.f32 %v978, %v978
        %v1235 = vmul.f32 %v979, %v979
        %v1236 = vmul.f32 %v980, %v980
        %v1237 = vmul.f32 %v981, %v981
        %v1238 = vmul.f32 %v982, %v982
        %v1239 = vmul.f32 %v983, %v983
        %v1240 = vmul.f32 %v984, %v984
        %v1241 = vmul.f32 %v985, %v985
        %v1242 = vmul.f32 %v986, %v986
        %v1243 = vmul.f32 %v987, %v987
        %v1244 = vmul.f32 %v988, %v988
        %v1245 = vmul.f32 %v989, %v989
        %v1246 = vmul.f32 %v990, %v990
        %v1247 = vmul.f32 %v991, %v991
        %v1248 = vmul.f32 %v992, %v992
        %v1249 = vmul.f32 %v993, %v993
        %v1250 = vmul.f32 %v994, %v994
        %v1251 = vmul.f32 %v995, %v995
        %v1252 = vmul.f32 %v996, %v996
        %v1253 = vmul.f32 %v997, %v997
        %v1254 = vmul.f32 %v998, %v998
        %v1255 = vmul.f32 %v999, %v999
        %v1256 = vmul.f32 %v1000, %v1000
        %v1257 = vld [vmem:[%s223] sm:$0xff]
        %v1258 = vadd.f32 %v1001, %v1002
        %v1259 = vadd.f32 %v1258, %v1003
        %v1260 = vadd.f32 %v1259, %v1004
        %v1261 = vadd.f32 %v1260, %v1005
        %v1262 = vadd.f32 %v1261, %v1006
        %v1263 = vadd.f32 %v1262, %v1007
        %v1264 = vadd.f32 %v1263, %v1008
        %v1265 = vadd.f32 %v1264, %v1009
        %v1266 = vadd.f32 %v1265, %v1010
        %v1267 = vadd.f32 %v1266, %v1011
        %v1268 = vadd.f32 %v1267, %v1012
        %v1269 = vadd.f32 %v1268, %v1013
        %v1270 = vadd.f32 %v1269, %v1014
        %v1271 = vadd.f32 %v1270, %v1015
        %v1272 = vadd.f32 %v1271, %v1016
        %v1273 = vadd.f32 %v1272, %v1017
        %v1274 = vadd.f32 %v1273, %v1018
        %v1275 = vadd.f32 %v1274, %v1019
        %v1276 = vadd.f32 %v1275, %v1020
        %v1277 = vadd.f32 %v1276, %v1021
        %v1278 = vadd.f32 %v1277, %v1022
        %v1279 = vadd.f32 %v1278, %v1023
        %v1280 = vadd.f32 %v1279, %v1024
        %v1281 = vadd.f32 %v1280, %v1025
        %v1282 = vadd.f32 %v1281, %v1026
        %v1283 = vadd.f32 %v1282, %v1027
        %v1284 = vadd.f32 %v1283, %v1028
        %v1285 = vadd.f32 %v1284, %v1029
        %v1286 = vadd.f32 %v1285, %v1030
        %v1287 = vadd.f32 %v1286, %v1031
        %v1288 = vadd.f32 %v1287, %v1032
        %v1289 = vadd.f32 %v1288, %v1033
        %v1290 = vadd.f32 %v1289, %v1034
        %v1291 = vadd.f32 %v1290, %v1035
        %v1292 = vadd.f32 %v1291, %v1036
        %v1293 = vadd.f32 %v1292, %v1037
        %v1294 = vadd.f32 %v1293, %v1038
        %v1295 = vadd.f32 %v1294, %v1039
        %v1296 = vadd.f32 %v1295, %v1040
        %v1297 = vadd.f32 %v1296, %v1041
        %v1298 = vadd.f32 %v1297, %v1042
        %v1299 = vadd.f32 %v1298, %v1043
        %v1300 = vadd.f32 %v1299, %v1044
        %v1301 = vadd.f32 %v1300, %v1045
        %v1302 = vadd.f32 %v1301, %v1046
        %v1303 = vadd.f32 %v1302, %v1047
        %v1304 = vadd.f32 %v1303, %v1048
        %v1305 = vadd.f32 %v1304, %v1049
        %v1306 = vadd.f32 %v1305, %v1050
        %v1307 = vadd.f32 %v1306, %v1051
        %v1308 = vadd.f32 %v1307, %v1052
        %v1309 = vadd.f32 %v1308, %v1053
        %v1310 = vadd.f32 %v1309, %v1054
        %v1311 = vadd.f32 %v1310, %v1055
        %v1312 = vadd.f32 %v1311, %v1056
        %v1313 = vadd.f32 %v1312, %v1057
        %v1314 = vadd.f32 %v1313, %v1058
        %v1315 = vadd.f32 %v1314, %v1059
        %v1316 = vadd.f32 %v1315, %v1060
        %v1317 = vadd.f32 %v1316, %v1061
        %v1318 = vadd.f32 %v1317, %v1062
        %v1319 = vadd.f32 %v1318, %v1063
        %v1320 = vadd.f32 %v1319, %v1064
        %v1321 = vadd.f32 %v1320, %v1065
        %v1322 = vadd.f32 %v1321, %v1066
        %v1323 = vadd.f32 %v1322, %v1067
        %v1324 = vadd.f32 %v1323, %v1068
        %v1325 = vadd.f32 %v1324, %v1069
        %v1326 = vadd.f32 %v1325, %v1070
        %v1327 = vadd.f32 %v1326, %v1071
        %v1328 = vadd.f32 %v1327, %v1072
        %v1329 = vadd.f32 %v1328, %v1073
        %v1330 = vadd.f32 %v1329, %v1074
        %v1331 = vadd.f32 %v1330, %v1075
        %v1332 = vadd.f32 %v1331, %v1076
        %v1333 = vadd.f32 %v1332, %v1077
        %v1334 = vadd.f32 %v1333, %v1078
        %v1335 = vadd.f32 %v1334, %v1079
        %v1336 = vadd.f32 %v1335, %v1080
        %v1337 = vadd.f32 %v1336, %v1081
        %v1338 = vadd.f32 %v1337, %v1082
        %v1339 = vadd.f32 %v1338, %v1083
        %v1340 = vadd.f32 %v1339, %v1084
        %v1341 = vadd.f32 %v1340, %v1085
        %v1342 = vadd.f32 %v1341, %v1086
        %v1343 = vadd.f32 %v1342, %v1087
        %v1344 = vadd.f32 %v1343, %v1088
        %v1345 = vadd.f32 %v1344, %v1089
        %v1346 = vadd.f32 %v1345, %v1090
        %v1347 = vadd.f32 %v1346, %v1091
        %v1348 = vadd.f32 %v1347, %v1092
        %v1349 = vadd.f32 %v1348, %v1093
        %v1350 = vadd.f32 %v1349, %v1094
        %v1351 = vadd.f32 %v1350, %v1095
        %v1352 = vadd.f32 %v1351, %v1096
        %v1353 = vadd.f32 %v1352, %v1097
        %v1354 = vadd.f32 %v1353, %v1098
        %v1355 = vadd.f32 %v1354, %v1099
        %v1356 = vadd.f32 %v1355, %v1100
        %v1357 = vadd.f32 %v1356, %v1101
        %v1358 = vadd.f32 %v1357, %v1102
        %v1359 = vadd.f32 %v1358, %v1103
        %v1360 = vadd.f32 %v1359, %v1104
        %v1361 = vadd.f32 %v1360, %v1105
        %v1362 = vadd.f32 %v1361, %v1106
        %v1363 = vadd.f32 %v1362, %v1107
        %v1364 = vadd.f32 %v1363, %v1108
        %v1365 = vadd.f32 %v1364, %v1109
        %v1366 = vadd.f32 %v1365, %v1110
        %v1367 = vadd.f32 %v1366, %v1111
        %v1368 = vadd.f32 %v1367, %v1112
        %v1369 = vadd.f32 %v1368, %v1113
        %v1370 = vadd.f32 %v1369, %v1114
        %v1371 = vadd.f32 %v1370, %v1115
        %v1372 = vadd.f32 %v1371, %v1116
        %v1373 = vadd.f32 %v1372, %v1117
        %v1374 = vadd.f32 %v1373, %v1118
        %v1375 = vadd.f32 %v1374, %v1119
        %v1376 = vadd.f32 %v1375, %v1120
        %v1377 = vadd.f32 %v1376, %v1121
        %v1378 = vadd.f32 %v1377, %v1122
        %v1379 = vadd.f32 %v1378, %v1123
        %v1380 = vadd.f32 %v1379, %v1124
        %v1381 = vadd.f32 %v1380, %v1125
        %v1382 = vadd.f32 %v1381, %v1126
        %v1383 = vadd.f32 %v1382, %v1127
        %v1384 = vadd.f32 %v1383, %v1128
        %v1385 = vadd.f32 %v1384, %v1129
        %v1386 = vadd.f32 %v1385, %v1130
        %v1387 = vadd.f32 %v1386, %v1131
        %v1388 = vadd.f32 %v1387, %v1132
        %v1389 = vadd.f32 %v1388, %v1133
        %v1390 = vadd.f32 %v1389, %v1134
        %v1391 = vadd.f32 %v1390, %v1135
        %v1392 = vadd.f32 %v1391, %v1136
        %v1393 = vadd.f32 %v1392, %v1137
        %v1394 = vadd.f32 %v1393, %v1138
        %v1395 = vadd.f32 %v1394, %v1139
        %v1396 = vadd.f32 %v1395, %v1140
        %v1397 = vadd.f32 %v1396, %v1141
        %v1398 = vadd.f32 %v1397, %v1142
        %v1399 = vadd.f32 %v1398, %v1143
        %v1400 = vadd.f32 %v1399, %v1144
        %v1401 = vadd.f32 %v1400, %v1145
        %v1402 = vadd.f32 %v1401, %v1146
        %v1403 = vadd.f32 %v1402, %v1147
        %v1404 = vadd.f32 %v1403, %v1148
        %v1405 = vadd.f32 %v1404, %v1149
        %v1406 = vadd.f32 %v1405, %v1150
        %v1407 = vadd.f32 %v1406, %v1151
        %v1408 = vadd.f32 %v1407, %v1152
        %v1409 = vadd.f32 %v1408, %v1153
        %v1410 = vadd.f32 %v1409, %v1154
        %v1411 = vadd.f32 %v1410, %v1155
        %v1412 = vadd.f32 %v1411, %v1156
        %v1413 = vadd.f32 %v1412, %v1157
        %v1414 = vadd.f32 %v1413, %v1158
        %v1415 = vadd.f32 %v1414, %v1159
        %v1416 = vadd.f32 %v1415, %v1160
        %v1417 = vadd.f32 %v1416, %v1161
        %v1418 = vadd.f32 %v1417, %v1162
        %v1419 = vadd.f32 %v1418, %v1163
        %v1420 = vadd.f32 %v1419, %v1164
        %v1421 = vadd.f32 %v1420, %v1165
        %v1422 = vadd.f32 %v1421, %v1166
        %v1423 = vadd.f32 %v1422, %v1167
        %v1424 = vadd.f32 %v1423, %v1168
        %v1425 = vadd.f32 %v1424, %v1169
        %v1426 = vadd.f32 %v1425, %v1170
        %v1427 = vadd.f32 %v1426, %v1171
        %v1428 = vadd.f32 %v1427, %v1172
        %v1429 = vadd.f32 %v1428, %v1173
        %v1430 = vadd.f32 %v1429, %v1174
        %v1431 = vadd.f32 %v1430, %v1175
        %v1432 = vadd.f32 %v1431, %v1176
        %v1433 = vadd.f32 %v1432, %v1177
        %v1434 = vadd.f32 %v1433, %v1178
        %v1435 = vadd.f32 %v1434, %v1179
        %v1436 = vadd.f32 %v1435, %v1180
        %v1437 = vadd.f32 %v1436, %v1181
        %v1438 = vadd.f32 %v1437, %v1182
        %v1439 = vadd.f32 %v1438, %v1183
        %v1440 = vadd.f32 %v1439, %v1184
        %v1441 = vadd.f32 %v1440, %v1185
        %v1442 = vadd.f32 %v1441, %v1186
        %v1443 = vadd.f32 %v1442, %v1187
        %v1444 = vadd.f32 %v1443, %v1188
        %v1445 = vadd.f32 %v1444, %v1189
        %v1446 = vadd.f32 %v1445, %v1190
        %v1447 = vadd.f32 %v1446, %v1191
        %v1448 = vadd.f32 %v1447, %v1192
        %v1449 = vadd.f32 %v1448, %v1193
        %v1450 = vadd.f32 %v1449, %v1194
        %v1451 = vadd.f32 %v1450, %v1195
        %v1452 = vadd.f32 %v1451, %v1196
        %v1453 = vadd.f32 %v1452, %v1197
        %v1454 = vadd.f32 %v1453, %v1198
        %v1455 = vadd.f32 %v1454, %v1199
        %v1456 = vadd.f32 %v1455, %v1200
        %v1457 = vadd.f32 %v1456, %v1201
        %v1458 = vadd.f32 %v1457, %v1202
        %v1459 = vadd.f32 %v1458, %v1203
        %v1460 = vadd.f32 %v1459, %v1204
        %v1461 = vadd.f32 %v1460, %v1205
        %v1462 = vadd.f32 %v1461, %v1206
        %v1463 = vadd.f32 %v1462, %v1207
        %v1464 = vadd.f32 %v1463, %v1208
        %v1465 = vadd.f32 %v1464, %v1209
        %v1466 = vadd.f32 %v1465, %v1210
        %v1467 = vadd.f32 %v1466, %v1211
        %v1468 = vadd.f32 %v1467, %v1212
        %v1469 = vadd.f32 %v1468, %v1213
        %v1470 = vadd.f32 %v1469, %v1214
        %v1471 = vadd.f32 %v1470, %v1215
        %v1472 = vadd.f32 %v1471, %v1216
        %v1473 = vadd.f32 %v1472, %v1217
        %v1474 = vadd.f32 %v1473, %v1218
        %v1475 = vadd.f32 %v1474, %v1219
        %v1476 = vadd.f32 %v1475, %v1220
        %v1477 = vadd.f32 %v1476, %v1221
        %v1478 = vadd.f32 %v1477, %v1222
        %v1479 = vadd.f32 %v1478, %v1223
        %v1480 = vadd.f32 %v1479, %v1224
        %v1481 = vadd.f32 %v1480, %v1225
        %v1482 = vadd.f32 %v1481, %v1226
        %v1483 = vadd.f32 %v1482, %v1227
        %v1484 = vadd.f32 %v1483, %v1228
        %v1485 = vadd.f32 %v1484, %v1229
        %v1486 = vadd.f32 %v1485, %v1230
        %v1487 = vadd.f32 %v1486, %v1231
        %v1488 = vadd.f32 %v1487, %v1232
        %v1489 = vadd.f32 %v1488, %v1233
        %v1490 = vadd.f32 %v1489, %v1234
        %v1491 = vadd.f32 %v1490, %v1235
        %v1492 = vadd.f32 %v1491, %v1236
        %v1493 = vadd.f32 %v1492, %v1237
        %v1494 = vadd.f32 %v1493, %v1238
        %v1495 = vadd.f32 %v1494, %v1239
        %v1496 = vadd.f32 %v1495, %v1240
        %v1497 = vadd.f32 %v1496, %v1241
        %v1498 = vadd.f32 %v1497, %v1242
        %v1499 = vadd.f32 %v1498, %v1243
        %v1500 = vadd.f32 %v1499, %v1244
        %v1501 = vadd.f32 %v1500, %v1245
        %v1502 = vadd.f32 %v1501, %v1246
        %v1503 = vadd.f32 %v1502, %v1247
        %v1504 = vadd.f32 %v1503, %v1248
        %v1505 = vadd.f32 %v1504, %v1249
        %v1506 = vadd.f32 %v1505, %v1250
        %v1507 = vadd.f32 %v1506, %v1251
        %v1508 = vadd.f32 %v1507, %v1252
        %v1509 = vadd.f32 %v1508, %v1253
        %v1510 = vadd.f32 %v1509, %v1254
        %v1511 = vadd.f32 %v1510, %v1255
        %v1512 = vadd.f32 %v1511, %v1256
        %v1513 = vadd.f32 %v1257, %v1512
        %1514 = vst [vmem:[%s223] sm:$0xff] %v1513
        %s1515 = sand.u32 %s98, 1
        %s1516 = scalar_lea.sflag [#allocation4], %s1515
        %s1517 = sand.u32 %s98, 1
        %s1518 = smul.addr %s1517, 8
        %s1519 = scalar_lea.vmem [#allocation7], %s1518
        // Predicated region
        $region41: #{tpu_custom_call.1} parent=27 // pred_check
          %p1520 = pneg %p108
        $region42: #{tpu_custom_call.1} parent=27 // pred_check_branch
          %1522 = sbr.rel (%p1520) target = $region44
        $region43: #{tpu_custom_call.1} parent=27 // pred_region
          %1524 = vsyncadd %s1516, 0
          %s1525 = smul.addr %s26, 8
          %s1526 = scalar_lea.hbm %s2, %s1525
          %s1528 = sshll.u32 %s1519, 4
          %s1529 = int_to_ptr.vmem [resolvable:$true] %s1528
          %s1530 = sshll.u32 %s1526, 4
          %s1531 = int_to_ptr.hbm [resolvable:$true] %s1530
          %1533 = dma.vmem_to_hbm [thread:$0]  %s1529, 128, %s1531, %s1516
        $region44: #{tpu_custom_call.1} parent=27 // pred_fallthru
          _
      $region28: #{tpu_custom_call.1} parent=5 // pred_fallthru
        _
      %p1534 = scmp.le.s32.totalorder 2, %s17
      // Predicated region
      $region45: #{tpu_custom_call.1} parent=5 // pred_check
        %p1535 = pneg %p1534
      $region46: #{tpu_custom_call.1} parent=5 // pred_check_branch
        %1537 = sbr.rel (%p1535) target = $region48
      $region47: #{tpu_custom_call.1} parent=5 // pred_region
        %s1538 = ssub.s32 %s17, 2
        // Predicated region
        $region49: #{tpu_custom_call.1} parent=47 // pred_check
          %p1539 = pneg %p114
        $region50: #{tpu_custom_call.1} parent=47 // pred_check_branch
          %1541 = sbr.rel (%p1539) target = $region52
        $region51: #{tpu_custom_call.1} parent=47 // pred_region
          %s1542 = sand.u32 %s99, 1
          %s1543 = scalar_lea.sflag [#allocation4], %s1542
          %s1544 = sand.u32 %s99, 1
          %s1545 = smul.addr %s1544, 8
          %s1546 = scalar_lea.vmem [#allocation7], %s1545
          %1548 = dma.done %s1543, 128
        $region52: #{tpu_custom_call.1} parent=47 // pred_fallthru
          _
      $region48: #{tpu_custom_call.1} parent=5 // pred_fallthru
        _
    $region6: #{tpu_custom_call.1} parent=1 // loop_footer
      %s21 = sadd.s32 1, %s17
    $region7: #{tpu_custom_call.1} parent=1 // loop_footer_branch
      %16 = sbr.rel target = $region3
    $region8: #{tpu_custom_call.1} parent=1 // loop_exit
      _
    %1549 = vsyncpa [#allocation3], 1
    %s1550 = scalar_lea.sflag [#allocation3], 1
    %1551 = vsyncpa %s1550, 1
    %1552 = vsyncpa [#allocation6], 1
    %s1553 = scalar_lea.sflag [#allocation6], 1
    %1554 = vsyncpa %s1553, 1
    %1555 = vsyncpa [#allocation4], 1
    %s1556 = scalar_lea.sflag [#allocation4], 1
    %1557 = vsyncpa %s1556, 1

</llo_original>
